<compile_context>
chip_gen: v7x
topology: tpu7x:2x2x1
jax: 0.10.0
libtpu: 0.0.40
codegen_flags: <defaults>
</compile_context>

<pallas_src>
import functools

import jax
import jax.numpy as jnp
from jax.experimental import pallas as pl
from jax.experimental.pallas import tpu as pltpu


def _minicolumn_kernel(x_ref, res_ref, we_ref, be_ref, wd_ref, bd_ref,
                       loss_part_ref, enc_ref, dec_ref,
                       *, total_rows, tile_rows, needs_mask):
    # Native-dtype tile (bf16 feeds the MXU directly; no forced f32 upcast).
    x = x_ref[...]

    # --- MSE partial for this batch tile (elementwise path in f32) ---------
    diff = res_ref[...].astype(jnp.float32) - x.astype(jnp.float32)
    if needs_mask:
        # Ragged last tile: zero the contribution of out-of-range (garbage)
        # rows before squaring/summing.
        row = jax.lax.broadcasted_iota(jnp.int32, diff.shape, 0)
        valid = (pl.program_id(0) * tile_rows + row) < total_rows
        diff = jnp.where(valid, diff, 0.0)
    sq = diff * diff
    # Lane-dense partial: reduce over rows only, keep the feature lanes.
    loss_part_ref[...] = jnp.sum(sq, axis=0, keepdims=True).reshape(
        1, 1, sq.shape[1])

    # --- encoder: ReLU(x @ W_e + b_e); MXU in input dtype, f32 accumulate ---
    h = jnp.dot(x, we_ref[...], preferred_element_type=jnp.float32)
    h = jnp.maximum(h + be_ref[...].astype(jnp.float32), 0.0)
    h_lo = h.astype(enc_ref.dtype)          # cast once; reuse for store + MXU
    enc_ref[...] = h_lo

    # --- decoder: ReLU(h @ W_d + b_d) ---------------------------------------
    d = jnp.dot(h_lo.astype(wd_ref.dtype), wd_ref[...],
                preferred_element_type=jnp.float32)
    d = jnp.maximum(d + bd_ref[...].astype(jnp.float32), 0.0)
    dec_ref[...] = d.astype(dec_ref.dtype)


def minicolumn_forward(x, prev_residual, w_enc, b_enc, w_dec, b_dec,
                       *, tile_b=None):
    """Returns (loss, encoded, decoded).

    x:             (B, in_size)
    prev_residual: (B, in_size)   -- the module's self.training_residual
    w_enc:         (in_size, latent_size)
    b_enc:         (1, latent_size)
    w_dec:         (latent_size, in_size)
    b_dec:         (1, in_size)

    `decoded` is aliased onto `prev_residual`'s buffer (it is the new
    training_residual); call through a jit with donate_argnums on
    prev_residual to realize the in-place update.
    """
    B, in_size = x.shape
    latent_size = w_enc.shape[1]
    itemsize = jnp.dtype(x.dtype).itemsize

    # ---- tile_b selection -------------------------------------------------
    # Aim for >= ~8 grid steps (>= 4 per v7x TensorCore under "parallel"),
    # but keep tiles large enough for efficient DMA bursts and capped at 1024
    # rows so the double-buffered footprint stays small.
    if tile_b is None:
        tile_b = max(128, min(1024, (B + 7) // 8))

    # Clamp so the double-buffered streaming IO (+ f32 temporaries) stays
    # comfortably inside v7x's 64 MiB/TC VMEM (target ~24 MiB resident).
    weight_bytes = ((in_size * latent_size + latent_size
                     + latent_size * in_size + in_size)
                    * jnp.dtype(w_enc.dtype).itemsize)
    per_row_bytes = (2 * (3 * in_size + latent_size) * itemsize   # x,res,enc,dec x2buf
                     + 4 * (2 * in_size + latent_size))           # f32 temporaries
    vmem_budget = 24 * 1024 * 1024
    max_rows = max(8, (vmem_budget - 2 * weight_bytes) // per_row_bytes)

    tile_b = int(min(tile_b, B, max_rows))
    if tile_b < B:
        tile_b = max(8, (tile_b // 8) * 8)   # sublane-aligned sub-tiles
    num_tiles = pl.cdiv(B, tile_b)
    needs_mask = (num_tiles * tile_b != B)

    kernel = functools.partial(_minicolumn_kernel,
                               total_rows=B, tile_rows=tile_b,
                               needs_mask=needs_mask)

    loss_parts, enc, dec = pl.pallas_call(
        kernel,
        out_shape=(
            jax.ShapeDtypeStruct((num_tiles, 1, in_size), jnp.float32),  # loss partials
            jax.ShapeDtypeStruct((B, latent_size), x.dtype),             # encoded
            jax.ShapeDtypeStruct((B, in_size), x.dtype),                 # decoded
        ),
        grid_spec=pltpu.PrefetchScalarGridSpec(
            num_scalar_prefetch=0,
            grid=(num_tiles,),
            in_specs=[
                pl.BlockSpec((tile_b, in_size), lambda i: (i, 0)),       # x tile
                pl.BlockSpec((tile_b, in_size), lambda i: (i, 0)),       # residual
                pl.BlockSpec((in_size, latent_size), lambda i: (0, 0)),  # W_e (resident)
                pl.BlockSpec((1, latent_size), lambda i: (0, 0)),        # b_e (resident)
                pl.BlockSpec((latent_size, in_size), lambda i: (0, 0)),  # W_d (resident)
                pl.BlockSpec((1, in_size), lambda i: (0, 0)),            # b_d (resident)
            ],
            out_specs=[
                pl.BlockSpec((1, 1, in_size), lambda i: (i, 0, 0)),      # lane-dense sq-err
                pl.BlockSpec((tile_b, latent_size), lambda i: (i, 0)),   # encoded tile
                pl.BlockSpec((tile_b, in_size), lambda i: (i, 0)),       # decoded tile
            ],
        ),
        compiler_params=pltpu.CompilerParams(
            dimension_semantics=("parallel",),     # v7x: shard tiles over 2 TCs
            vmem_limit_bytes=32 * 1024 * 1024,     # explicit cap (v7x: 64 MiB/TC)
        ),
        # decoded becomes the new training_residual -> reuse prev_residual's buffer.
        input_output_aliases={1: 2},
    )(x, prev_residual, w_enc, b_enc, w_dec, b_dec)

    # Exact MSE: total squared-error over all real elements / (B * in_size).
    loss = jnp.sum(loss_parts) / jnp.float32(B * in_size)
    return loss, enc, dec


# Jitted entry point: donating prev_residual lets the pallas-level alias
# actually write `decoded` in place of the old training_residual.
minicolumn_forward_jit = jax.jit(minicolumn_forward,
                                 donate_argnums=(1,),
                                 static_argnames=("tile_b",))


if __name__ == "__main__":
    # Lane-dense, MXU-friendly feature dims (multiples of 128).
    in_size, latent_size = 256, 128
    dtype = jnp.bfloat16   # bf16 operands into the MXU, f32 accumulation

    key = jax.random.PRNGKey(0)
    k_x, k_we, k_be, k_wd, k_bd = jax.random.split(key, 5)

    # Deterministic parameter init (uniform, roughly matching nn.Linear scale).
    bound_e = 1.0 / (in_size ** 0.5)
    bound_d = 1.0 / (latent_size ** 0.5)
    w_enc = jax.random.uniform(k_we, (in_size, latent_size), jnp.float32,
                               -bound_e, bound_e).astype(dtype)
    b_enc = jax.random.uniform(k_be, (1, latent_size), jnp.float32,
                               -bound_e, bound_e).astype(dtype)
    w_dec = jax.random.uniform(k_wd, (latent_size, in_size), jnp.float32,
                               -bound_d, bound_d).astype(dtype)
    b_dec = jax.random.uniform(k_bd, (1, in_size), jnp.float32,
                               -bound_d, bound_d).astype(dtype)

    def reference(x, res):
        # Plain-JAX reference with the same dtype flow.
        xf, rf = x.astype(jnp.float32), res.astype(jnp.float32)
        loss = jnp.mean((rf - xf) ** 2)
        h = jnp.dot(x, w_enc, preferred_element_type=jnp.float32)
        h = jnp.maximum(h + b_enc.astype(jnp.float32), 0.0)
        enc = h.astype(dtype)
        d = jnp.dot(enc, w_dec, preferred_element_type=jnp.float32)
        d = jnp.maximum(d + b_dec.astype(jnp.float32), 0.0)
        dec = d.astype(dtype)
        return loss, enc, dec

    # B=512 exercises the evenly-divided grid; B=200 exercises the ragged
    # last tile (in-kernel row masking, no wrapper-side padding copies).
    for B in (512, 200):
        kx, kr = jax.random.split(jax.random.fold_in(k_x, B))
        x = jax.random.normal(kx, (B, in_size), jnp.float32).astype(dtype)
        prev_residual = jax.random.normal(kr, (B, in_size),
                                          jnp.float32).astype(dtype)

        # Reference is computed (and materialized) before the kernel call,
        # since prev_residual is donated / overwritten by `decoded`.
        ref_loss, ref_enc, ref_dec = jax.block_until_ready(
            reference(x, prev_residual))

        loss, enc, dec = jax.block_until_ready(
            minicolumn_forward_jit(x, prev_residual,
                                   w_enc, b_enc, w_dec, b_dec))

        assert jnp.allclose(loss, ref_loss, rtol=1e-3, atol=1e-4), \
            f"loss mismatch at B={B}"
        assert jnp.allclose(enc.astype(jnp.float32), ref_enc.astype(jnp.float32),
                            rtol=2e-2, atol=2e-2), f"encoder mismatch at B={B}"
        assert jnp.allclose(dec.astype(jnp.float32), ref_dec.astype(jnp.float32),
                            rtol=2e-2, atol=2e-2), f"decoder mismatch at B={B}"

    print("KERNEL_OK")
</pallas_src>

<mosaic_0001>
module attributes {stable_mosaic.version = 11 : i64} {
  func.func @_minicolumn_kernel(%arg0: i32, %arg1: memref<128x256xbf16, #tpu.memory_space<vmem>>, %arg2: memref<128x256xbf16, #tpu.memory_space<vmem>>, %arg3: memref<256x128xbf16, #tpu.memory_space<vmem>>, %arg4: memref<1x128xbf16, #tpu.memory_space<vmem>>, %arg5: memref<128x256xbf16, #tpu.memory_space<vmem>>, %arg6: memref<1x256xbf16, #tpu.memory_space<vmem>>, %arg7: memref<1x1x256xf32, #tpu.memory_space<vmem>>, %arg8: memref<128x128xbf16, #tpu.memory_space<vmem>>, %arg9: memref<128x256xbf16, #tpu.memory_space<vmem>>) attributes {dimension_semantics = [#tpu.dimension_semantics<parallel>], iteration_bounds = array<i64: 4>, scalar_prefetch = 0 : i64, scratch_operands = 0 : i64, tpu.core_type = #tpu.core_type<tc>, window_params = [{transform_indices = @transform_0, window_bounds = array<i64: 128, 256>}, {transform_indices = @transform_1, window_bounds = array<i64: 128, 256>}, {pipeline_mode = #tpu.pipeline_mode<synchronous>, transform_indices = @transform_2, window_bounds = array<i64: 256, 128>}, {pipeline_mode = #tpu.pipeline_mode<synchronous>, transform_indices = @transform_3, window_bounds = array<i64: 1, 128>}, {pipeline_mode = #tpu.pipeline_mode<synchronous>, transform_indices = @transform_4, window_bounds = array<i64: 128, 256>}, {pipeline_mode = #tpu.pipeline_mode<synchronous>, transform_indices = @transform_5, window_bounds = array<i64: 1, 256>}, {transform_indices = @transform_6, window_bounds = array<i64: 1, 1, 256>}, {transform_indices = @transform_7, window_bounds = array<i64: 128, 128>}, {transform_indices = @transform_8, window_bounds = array<i64: 128, 256>}]} {
    %c0 = arith.constant 0 : index
    %c0_0 = arith.constant 0 : index
    %0 = vector.load %arg1[%c0, %c0_0] : memref<128x256xbf16, #tpu.memory_space<vmem>>, vector<128x256xbf16>
    %c0_1 = arith.constant 0 : index
    %c0_2 = arith.constant 0 : index
    %1 = vector.load %arg2[%c0_1, %c0_2] : memref<128x256xbf16, #tpu.memory_space<vmem>>, vector<128x256xbf16>
    %2 = arith.extf %1 : vector<128x256xbf16> to vector<128x256xf32>
    %3 = arith.extf %0 : vector<128x256xbf16> to vector<128x256xf32>
    %4 = arith.subf %2, %3 : vector<128x256xf32>
    %5 = arith.mulf %4, %4 : vector<128x256xf32>
    %cst = arith.constant dense<0.000000e+00> : vector<256xf32>
    %6 = vector.multi_reduction <add>, %5, %cst [0] : vector<128x256xf32> to vector<256xf32>
    %7 = vector.shape_cast %6 : vector<256xf32> to vector<1x256xf32>
    %8 = vector.shape_cast %7 : vector<1x256xf32> to vector<1x1x256xf32>
    %c0_3 = arith.constant 0 : index
    %c0_4 = arith.constant 0 : index
    %c0_5 = arith.constant 0 : index
    %9 = vector.load %arg7[%c0_3, %c0_4, %c0_5] : memref<1x1x256xf32, #tpu.memory_space<vmem>>, vector<1x1x256xf32>
    tpu.vector_store %arg7[%c0_3, %c0_4, %c0_5], %8 {strides = array<i32>} : memref<1x1x256xf32, #tpu.memory_space<vmem>>, vector<1x1x256xf32>,
    %c0_6 = arith.constant 0 : index
    %c0_7 = arith.constant 0 : index
    %10 = vector.load %arg3[%c0_6, %c0_7] : memref<256x128xbf16, #tpu.memory_space<vmem>>, vector<256x128xbf16>
    %cst_8 = arith.constant dense<0.000000e+00> : vector<128x128xf32>
    %11 = tpu.matmul %0, %10, %cst_8 {dimension_numbers = #tpu.dot_dimension_numbers<[1], [0], [0], [1], [0, 0, 1, 1], [], []>} : vector<128x256xbf16>, vector<256x128xbf16>, vector<128x128xf32> -> vector<128x128xf32>
    %c0_9 = arith.constant 0 : index
    %c0_10 = arith.constant 0 : index
    %12 = vector.load %arg4[%c0_9, %c0_10] : memref<1x128xbf16, #tpu.memory_space<vmem>>, vector<1x128xbf16>
    %13 = arith.extf %12 : vector<1x128xbf16> to vector<1x128xf32>
    %14 = vector.broadcast %13 : vector<1x128xf32> to vector<128x128xf32>
    %15 = arith.addf %11, %14 : vector<128x128xf32>
    %cst_11 = arith.constant 0.000000e+00 : f32
    %16 = vector.broadcast %cst_11 : f32 to vector<128x128xf32>
    %17 = arith.maximumf %15, %16 : vector<128x128xf32>
    %18 = arith.truncf %17 : vector<128x128xf32> to vector<128x128xbf16>
    %c0_12 = arith.constant 0 : index
    %c0_13 = arith.constant 0 : index
    %19 = vector.load %arg8[%c0_12, %c0_13] : memref<128x128xbf16, #tpu.memory_space<vmem>>, vector<128x128xbf16>
    tpu.vector_store %arg8[%c0_12, %c0_13], %18 {strides = array<i32>} : memref<128x128xbf16, #tpu.memory_space<vmem>>, vector<128x128xbf16>,
    %c0_14 = arith.constant 0 : index
    %c0_15 = arith.constant 0 : index
    %20 = vector.load %arg5[%c0_14, %c0_15] : memref<128x256xbf16, #tpu.memory_space<vmem>>, vector<128x256xbf16>
    %cst_16 = arith.constant dense<0.000000e+00> : vector<128x256xf32>
    %21 = tpu.matmul %18, %20, %cst_16 {dimension_numbers = #tpu.dot_dimension_numbers<[1], [0], [0], [1], [0, 0, 1, 1], [], []>} : vector<128x128xbf16>, vector<128x256xbf16>, vector<128x256xf32> -> vector<128x256xf32>
    %c0_17 = arith.constant 0 : index
    %c0_18 = arith.constant 0 : index
    %22 = vector.load %arg6[%c0_17, %c0_18] : memref<1x256xbf16, #tpu.memory_space<vmem>>, vector<1x256xbf16>
    %23 = arith.extf %22 : vector<1x256xbf16> to vector<1x256xf32>
    %24 = vector.broadcast %23 : vector<1x256xf32> to vector<128x256xf32>
    %25 = arith.addf %21, %24 : vector<128x256xf32>
    %cst_19 = arith.constant 0.000000e+00 : f32
    %26 = vector.broadcast %cst_19 : f32 to vector<128x256xf32>
    %27 = arith.maximumf %25, %26 : vector<128x256xf32>
    %28 = arith.truncf %27 : vector<128x256xf32> to vector<128x256xbf16>
    %c0_20 = arith.constant 0 : index
    %c0_21 = arith.constant 0 : index
    %29 = vector.load %arg9[%c0_20, %c0_21] : memref<128x256xbf16, #tpu.memory_space<vmem>>, vector<128x256xbf16>
    tpu.vector_store %arg9[%c0_20, %c0_21], %28 {strides = array<i32>} : memref<128x256xbf16, #tpu.memory_space<vmem>>, vector<128x256xbf16>,
    return
  }
  func.func @transform_0(%arg0: i32) -> (i32, i32) {
    %c0_i32 = arith.constant 0 : i32
    %c0_i32_0 = arith.constant 0 : i32
    return %arg0, %c0_i32 : i32, i32
  }
  func.func @transform_1(%arg0: i32) -> (i32, i32) {
    %c0_i32 = arith.constant 0 : i32
    %c0_i32_0 = arith.constant 0 : i32
    return %arg0, %c0_i32 : i32, i32
  }
  func.func @transform_2(%arg0: i32) -> (i32, i32) {
    %c0_i32 = arith.constant 0 : i32
    %c0_i32_0 = arith.constant 0 : i32
    %c0_i32_1 = arith.constant 0 : i32
    return %c0_i32, %c0_i32_0 : i32, i32
  }
  func.func @transform_3(%arg0: i32) -> (i32, i32) {
    %c0_i32 = arith.constant 0 : i32
    %c0_i32_0 = arith.constant 0 : i32
    %c0_i32_1 = arith.constant 0 : i32
    return %c0_i32, %c0_i32_0 : i32, i32
  }
  func.func @transform_4(%arg0: i32) -> (i32, i32) {
    %c0_i32 = arith.constant 0 : i32
    %c0_i32_0 = arith.constant 0 : i32
    %c0_i32_1 = arith.constant 0 : i32
    return %c0_i32, %c0_i32_0 : i32, i32
  }
  func.func @transform_5(%arg0: i32) -> (i32, i32) {
    %c0_i32 = arith.constant 0 : i32
    %c0_i32_0 = arith.constant 0 : i32
    %c0_i32_1 = arith.constant 0 : i32
    return %c0_i32, %c0_i32_0 : i32, i32
  }
  func.func @transform_6(%arg0: i32) -> (i32, i32, i32) {
    %c0_i32 = arith.constant 0 : i32
    %c0_i32_0 = arith.constant 0 : i32
    %c0_i32_1 = arith.constant 0 : i32
    return %arg0, %c0_i32, %c0_i32_0 : i32, i32, i32
  }
  func.func @transform_7(%arg0: i32) -> (i32, i32) {
    %c0_i32 = arith.constant 0 : i32
    %c0_i32_0 = arith.constant 0 : i32
    return %arg0, %c0_i32 : i32, i32
  }
  func.func @transform_8(%arg0: i32) -> (i32, i32) {
    %c0_i32 = arith.constant 0 : i32
    %c0_i32_0 = arith.constant 0 : i32
    return %arg0, %c0_i32 : i32, i32
  }
}

</mosaic_0001>

<llo_original>
// kernel: minicolumn_forward.1
$region0: #{minicolumn_forward.1}
  #allocation0 [shape = 'u32[]', space=smem, size = 0x4, offset = 0x4, fixed_abs, tag = 'smem constant byte address 0x4 - core index']
  #allocation1 [shape = 'u32[144,128]{1,0:T(1,128)}', space=vmem, size = 0x12000, scoped, tag = 'internal scratch']
  %s0 = inlined_call_operand.hbm [shape: bf16[512,256], index: 0, kind: input, shape index: {}]
  %s1 = inlined_call_operand.hbm [shape: bf16[512,256], index: 1, kind: input, shape index: {}, may-alias: {1,8}]
  %s2 = inlined_call_operand.hbm [shape: bf16[256,128], index: 2, kind: input, shape index: {}]
  %s3 = inlined_call_operand.vmem [shape: bf16[1,128], index: 3, kind: input, shape index: {}]
  %s4 = inlined_call_operand.hbm [shape: bf16[128,256], index: 4, kind: input, shape index: {}]
  %s5 = inlined_call_operand.vmem [shape: bf16[1,256], index: 5, kind: input, shape index: {}]
  %s6 = inlined_call_operand.vmem [shape: f32[4,1,256], index: 6, kind: output, shape index: {0}]
  %s7 = inlined_call_operand.hbm [shape: bf16[512,128], index: 7, kind: output, shape index: {1}]
  %s8 = inlined_call_operand.hbm [shape: bf16[512,256], index: 8, kind: output, shape index: {2}, may-alias: {1,8}]
  %9 = xla_tuple %s6, %s7, %s8
  %s10 = sld [smem:[#allocation0]]
  $region89: #{minicolumn_forward.1} parent=0
    _
  %s12 = ssub.s32 1, %s10
  %s13 = scalar_select 0, %s12, %s10
  $region1: #{minicolumn_forward.1} parent=0
    #allocation2 [shape = 'u8[131072]{0}', space=vmem, size = 0x20000, scoped, tag = 'input window, operand 0']
    #allocation3 [shape = 's32[2]{0}', space=sflag, size = 0x8, scoped, tag = 'scoped memory for minicolumn_forward.1']
    #allocation4 [shape = 's32[2]{0}', space=sflag, size = 0x8, scoped, tag = 'scoped memory for minicolumn_forward.1']
    #allocation5 [shape = 'u8[131072]{0}', space=vmem, size = 0x20000, scoped, tag = 'input window, operand 1']
    #allocation6 [shape = 's32[2]{0}', space=sflag, size = 0x8, scoped, tag = 'scoped memory for minicolumn_forward.1']
    #allocation7 [shape = 'u8[65536]{0}', space=vmem, size = 0x10000, scoped, tag = 'input window, operand 2, single buffered']
    #allocation8 [shape = 'u8[65536]{0}', space=vmem, size = 0x10000, scoped, tag = 'input window, operand 4, single buffered']
    #allocation9 [shape = 's32[1]{0}', space=sflag, size = 0x4, scoped, tag = 'scoped memory for minicolumn_forward.1']
    #allocation10 [shape = 'u8[65536]{0}', space=vmem, size = 0x10000, scoped, tag = 'output window, operand 1']
    #allocation11 [shape = 'u8[131072]{0}', space=vmem, size = 0x20000, scoped, tag = 'output window, operand 2']
    #allocation12 [shape = 's32[2]{0}', space=sflag, size = 0x8, scoped, tag = 'scoped memory for minicolumn_forward.1']
    %14 = vsyncpa [#allocation3], 0
    %s15 = scalar_lea.sflag [#allocation3], 1
    %16 = vsyncpa %s15, 0
    %17 = vsyncpa [#allocation6], 0
    %s18 = scalar_lea.sflag [#allocation6], 1
    %19 = vsyncpa %s18, 0
    %20 = vsyncpa [#allocation9], 0
    %21 = vsyncpa [#allocation4], 0
    %s22 = scalar_lea.sflag [#allocation4], 1
    %23 = vsyncpa %s22, 0
    %24 = vsyncpa [#allocation12], 0
    %s25 = scalar_lea.sflag [#allocation12], 1
    %26 = vsyncpa %s25, 0
    loop: start=0, step=1, limit=6
    $region2: #{minicolumn_forward.1} parent=1 // loop_pre_header
      _
    $region3: #{minicolumn_forward.1} parent=1 // loop_header
      %s28 = sphi 0, %s32
      %p29 = scmp.ge.s32.totalorder %s28, 6
      %s38 = sphi 0, %s40
      %s41 = sphi 0, %s38
      %s42 = sphi 0, %s41
      %s58 = sphi 0, %s42
      %s64 = sphi 0, %s66
      %s67 = sphi 0, %s64
      %s68 = sphi 0, %s67
      %s84 = sphi 0, %s68
      %s88 = sphi 0, %s88
      %s90 = sphi 0, %s88
      %s91 = sphi 0, %s90
      %s105 = sphi 0, %s91
      %s109 = sphi 0, %s109
      %s111 = sphi 0, %s109
      %s112 = sphi 0, %s111
      %s126 = sphi 0, %s112
      %s130 = sphi 0, %s130
      %s132 = sphi 0, %s130
      %s133 = sphi 0, %s132
      %s147 = sphi 0, %s133
      %s151 = sphi 0, %s151
      %s153 = sphi 0, %s151
      %s154 = sphi 0, %s153
      %s168 = sphi 0, %s154
      %s174 = sphi 0, %s176
      %s177 = sphi 0, %s174
      %s178 = sphi 0, %s177
      %s194 = sphi 0, %s178
      %s200 = sphi 0, %s202
      %s203 = sphi 0, %s200
      %s204 = sphi 0, %s203
      %s220 = sphi 0, %s204
      %s226 = sphi 0, %s228
      %s229 = sphi 0, %s226
      %s230 = sphi 0, %s229
      %s246 = sphi 0, %s230
    $region4: #{minicolumn_forward.1} parent=1 // loop_header_branch
      %31 = sbr.rel (%p29) target = $region8
    $region5: #{minicolumn_forward.1} parent=1 // loop_body
      %s33 = ssub.s32 %s28, 1
      %s34 = ssub.s32 %s28, 2
      %s35 = sadd.s32 %s28, 1
      %s36 = ssub.s32 %s28, %s35
      %p37 = scmp.eq.s32.totalorder %s36, 0
      %s39 = sadd.s32 %s38, 1
      %s40 = scalar_select %p37, %s38, %s39
      %p43 = pneg %p37
      %p44 = scmp.eq.s32.totalorder %s28, 3
      %p45 = por %p43, %p44
      %p46 = scmp.ne.s32.totalorder %s38, %s41
      %p47 = scmp.eq.s32.totalorder %s28, 0
      %p48 = por %p46, %p47
      %p49 = scmp.ne.s32.totalorder %s38, %s41
      %p50 = scmp.eq.s32.totalorder %s33, 3
      %p51 = por %p49, %p50
      %p52 = scmp.ne.s32.totalorder %s41, %s42
      %p53 = scmp.eq.s32.totalorder %s33, 0
      %p54 = por %p52, %p53
      %p55 = scmp.ne.s32.totalorder %s41, %s42
      %p56 = scmp.eq.s32.totalorder %s34, 3
      %p57 = por %p55, %p56
      %p59 = scmp.ne.s32.totalorder %s42, %s58
      %p60 = scmp.eq.s32.totalorder %s34, 0
      %p61 = por %p59, %p60
      %s62 = ssub.s32 %s28, %s35
      %p63 = scmp.eq.s32.totalorder %s62, 0
      %s65 = sadd.s32 %s64, 1
      %s66 = scalar_select %p63, %s64, %s65
      %p69 = pneg %p63
      %p70 = scmp.eq.s32.totalorder %s28, 3
      %p71 = por %p69, %p70
      %p72 = scmp.ne.s32.totalorder %s64, %s67
      %p73 = scmp.eq.s32.totalorder %s28, 0
      %p74 = por %p72, %p73
      %p75 = scmp.ne.s32.totalorder %s64, %s67
      %p76 = scmp.eq.s32.totalorder %s33, 3
      %p77 = por %p75, %p76
      %p78 = scmp.ne.s32.totalorder %s67, %s68
      %p79 = scmp.eq.s32.totalorder %s33, 0
      %p80 = por %p78, %p79
      %p81 = scmp.ne.s32.totalorder %s67, %s68
      %p82 = scmp.eq.s32.totalorder %s34, 3
      %p83 = por %p81, %p82
      %p85 = scmp.ne.s32.totalorder %s68, %s84
      %p86 = scmp.eq.s32.totalorder %s34, 0
      %p87 = por %p85, %p86
      %s89 = sadd.s32 %s88, 1
      %p92 = scmp.eq.s32.totalorder %s28, 3
      %p93 = scmp.ne.s32.totalorder %s88, %s90
      %p94 = scmp.eq.s32.totalorder %s28, 0
      %p95 = por %p93, %p94
      %p96 = scmp.ne.s32.totalorder %s88, %s90
      %p97 = scmp.eq.s32.totalorder %s33, 3
      %p98 = por %p96, %p97
      %p99 = scmp.ne.s32.totalorder %s90, %s91
      %p100 = scmp.eq.s32.totalorder %s33, 0
      %p101 = por %p99, %p100
      %p102 = scmp.ne.s32.totalorder %s90, %s91
      %p103 = scmp.eq.s32.totalorder %s34, 3
      %p104 = por %p102, %p103
      %p106 = scmp.ne.s32.totalorder %s91, %s105
      %p107 = scmp.eq.s32.totalorder %s34, 0
      %p108 = por %p106, %p107
      %s110 = sadd.s32 %s109, 1
      %p113 = scmp.eq.s32.totalorder %s28, 3
      %p114 = scmp.ne.s32.totalorder %s109, %s111
      %p115 = scmp.eq.s32.totalorder %s28, 0
      %p116 = por %p114, %p115
      %p117 = scmp.ne.s32.totalorder %s109, %s111
      %p118 = scmp.eq.s32.totalorder %s33, 3
      %p119 = por %p117, %p118
      %p120 = scmp.ne.s32.totalorder %s111, %s112
      %p121 = scmp.eq.s32.totalorder %s33, 0
      %p122 = por %p120, %p121
      %p123 = scmp.ne.s32.totalorder %s111, %s112
      %p124 = scmp.eq.s32.totalorder %s34, 3
      %p125 = por %p123, %p124
      %p127 = scmp.ne.s32.totalorder %s112, %s126
      %p128 = scmp.eq.s32.totalorder %s34, 0
      %p129 = por %p127, %p128
      %s131 = sadd.s32 %s130, 1
      %p134 = scmp.eq.s32.totalorder %s28, 3
      %p135 = scmp.ne.s32.totalorder %s130, %s132
      %p136 = scmp.eq.s32.totalorder %s28, 0
      %p137 = por %p135, %p136
      %p138 = scmp.ne.s32.totalorder %s130, %s132
      %p139 = scmp.eq.s32.totalorder %s33, 3
      %p140 = por %p138, %p139
      %p141 = scmp.ne.s32.totalorder %s132, %s133
      %p142 = scmp.eq.s32.totalorder %s33, 0
      %p143 = por %p141, %p142
      %p144 = scmp.ne.s32.totalorder %s132, %s133
      %p145 = scmp.eq.s32.totalorder %s34, 3
      %p146 = por %p144, %p145
      %p148 = scmp.ne.s32.totalorder %s133, %s147
      %p149 = scmp.eq.s32.totalorder %s34, 0
      %p150 = por %p148, %p149
      %s152 = sadd.s32 %s151, 1
      %p155 = scmp.eq.s32.totalorder %s28, 3
      %p156 = scmp.ne.s32.totalorder %s151, %s153
      %p157 = scmp.eq.s32.totalorder %s28, 0
      %p158 = por %p156, %p157
      %p159 = scmp.ne.s32.totalorder %s151, %s153
      %p160 = scmp.eq.s32.totalorder %s33, 3
      %p161 = por %p159, %p160
      %p162 = scmp.ne.s32.totalorder %s153, %s154
      %p163 = scmp.eq.s32.totalorder %s33, 0
      %p164 = por %p162, %p163
      %p165 = scmp.ne.s32.totalorder %s153, %s154
      %p166 = scmp.eq.s32.totalorder %s34, 3
      %p167 = por %p165, %p166
      %p169 = scmp.ne.s32.totalorder %s154, %s168
      %p170 = scmp.eq.s32.totalorder %s34, 0
      %p171 = por %p169, %p170
      %s172 = ssub.s32 %s28, %s35
      %p173 = scmp.eq.s32.totalorder %s172, 0
      %s175 = sadd.s32 %s174, 1
      %s176 = scalar_select %p173, %s174, %s175
      %p179 = pneg %p173
      %p180 = scmp.eq.s32.totalorder %s28, 3
      %p181 = por %p179, %p180
      %p182 = scmp.ne.s32.totalorder %s174, %s177
      %p183 = scmp.eq.s32.totalorder %s28, 0
      %p184 = por %p182, %p183
      %p185 = scmp.ne.s32.totalorder %s174, %s177
      %p186 = scmp.eq.s32.totalorder %s33, 3
      %p187 = por %p185, %p186
      %p188 = scmp.ne.s32.totalorder %s177, %s178
      %p189 = scmp.eq.s32.totalorder %s33, 0
      %p190 = por %p188, %p189
      %p191 = scmp.ne.s32.totalorder %s177, %s178
      %p192 = scmp.eq.s32.totalorder %s34, 3
      %p193 = por %p191, %p192
      %p195 = scmp.ne.s32.totalorder %s178, %s194
      %p196 = scmp.eq.s32.totalorder %s34, 0
      %p197 = por %p195, %p196
      %s198 = ssub.s32 %s28, %s35
      %p199 = scmp.eq.s32.totalorder %s198, 0
      %s201 = sadd.s32 %s200, 1
      %s202 = scalar_select %p199, %s200, %s201
      %p205 = pneg %p199
      %p206 = scmp.eq.s32.totalorder %s28, 3
      %p207 = por %p205, %p206
      %p208 = scmp.ne.s32.totalorder %s200, %s203
      %p209 = scmp.eq.s32.totalorder %s28, 0
      %p210 = por %p208, %p209
      %p211 = scmp.ne.s32.totalorder %s200, %s203
      %p212 = scmp.eq.s32.totalorder %s33, 3
      %p213 = por %p211, %p212
      %p214 = scmp.ne.s32.totalorder %s203, %s204
      %p215 = scmp.eq.s32.totalorder %s33, 0
      %p216 = por %p214, %p215
      %p217 = scmp.ne.s32.totalorder %s203, %s204
      %p218 = scmp.eq.s32.totalorder %s34, 3
      %p219 = por %p217, %p218
      %p221 = scmp.ne.s32.totalorder %s204, %s220
      %p222 = scmp.eq.s32.totalorder %s34, 0
      %p223 = por %p221, %p222
      %s224 = ssub.s32 %s28, %s35
      %p225 = scmp.eq.s32.totalorder %s224, 0
      %s227 = sadd.s32 %s226, 1
      %s228 = scalar_select %p225, %s226, %s227
      %p231 = pneg %p225
      %p232 = scmp.eq.s32.totalorder %s28, 3
      %p233 = por %p231, %p232
      %p234 = scmp.ne.s32.totalorder %s226, %s229
      %p235 = scmp.eq.s32.totalorder %s28, 0
      %p236 = por %p234, %p235
      %p237 = scmp.ne.s32.totalorder %s226, %s229
      %p238 = scmp.eq.s32.totalorder %s33, 3
      %p239 = por %p237, %p238
      %p240 = scmp.ne.s32.totalorder %s229, %s230
      %p241 = scmp.eq.s32.totalorder %s33, 0
      %p242 = por %p240, %p241
      %p243 = scmp.ne.s32.totalorder %s229, %s230
      %p244 = scmp.eq.s32.totalorder %s34, 3
      %p245 = por %p243, %p244
      %p247 = scmp.ne.s32.totalorder %s230, %s246
      %p248 = scmp.eq.s32.totalorder %s34, 0
      %p249 = por %p247, %p248
      %p250 = scmp.le.s32.totalorder 1, %s28
      %p251 = scmp.lt.s32.totalorder %s28, 5
      %p252 = pnand %p250, %p251
      %p253 = pneg %p252
      // Predicated region
      $region9: #{minicolumn_forward.1} parent=5 // pred_check
        _
      $region10: #{minicolumn_forward.1} parent=5 // pred_check_branch
        %255 = sbr.rel (%p252) target = $region12
      $region11: #{minicolumn_forward.1} parent=5 // pred_region
        %s256 = ssub.s32 %s28, 1
        // Predicated region
        $region13: #{minicolumn_forward.1} parent=11 // pred_check
          %p257 = pneg %p101
        $region14: #{minicolumn_forward.1} parent=11 // pred_check_branch
          %259 = sbr.rel (%p257) target = $region16
        $region15: #{minicolumn_forward.1} parent=11 // pred_region
          %s261 = ssub.s32 2048, 2048
          %262 = vsyncadd [#allocation6], %s261
          %s263 = sshll.u32 [#allocation7], 4
          %s264 = int_to_ptr.vmem [resolvable:$true] %s263
          %269 = dma.hbm_to_vmem [thread:$0]  %s2, 2048, %s264, [#allocation6], 64, 64, 4
        $region16: #{minicolumn_forward.1} parent=11 // pred_fallthru
          _
        // Predicated region
        $region17: #{minicolumn_forward.1} parent=11 // pred_check
          %p270 = pneg %p122
        $region18: #{minicolumn_forward.1} parent=11 // pred_check_branch
          %272 = sbr.rel (%p270) target = $region20
        $region19: #{minicolumn_forward.1} parent=11 // pred_region
          _
        $region20: #{minicolumn_forward.1} parent=11 // pred_fallthru
          _
        // Predicated region
        $region21: #{minicolumn_forward.1} parent=11 // pred_check
          %p273 = pneg %p143
        $region22: #{minicolumn_forward.1} parent=11 // pred_check_branch
          %275 = sbr.rel (%p273) target = $region24
        $region23: #{minicolumn_forward.1} parent=11 // pred_region
          %s277 = ssub.s32 2048, 2048
          %278 = vsyncadd [#allocation9], %s277
          %s279 = sshll.u32 [#allocation8], 4
          %s280 = int_to_ptr.vmem [resolvable:$true] %s279
          %285 = dma.hbm_to_vmem [thread:$0]  %s4, 2048, %s280, [#allocation9], 128, 128, 8
        $region24: #{minicolumn_forward.1} parent=11 // pred_fallthru
          _
        // Predicated region
        $region25: #{minicolumn_forward.1} parent=11 // pred_check
          %p286 = pneg %p164
        $region26: #{minicolumn_forward.1} parent=11 // pred_check_branch
          %288 = sbr.rel (%p286) target = $region28
        $region27: #{minicolumn_forward.1} parent=11 // pred_region
          _
        $region28: #{minicolumn_forward.1} parent=11 // pred_fallthru
          _
      $region12: #{minicolumn_forward.1} parent=5 // pred_fallthru
        _
      %p289 = scmp.lt.s32.totalorder %s28, 4
      // Predicated region
      $region29: #{minicolumn_forward.1} parent=5 // pred_check
        %p290 = pneg %p289
      $region30: #{minicolumn_forward.1} parent=5 // pred_check_branch
        %292 = sbr.rel (%p290) target = $region32
      $region31: #{minicolumn_forward.1} parent=5 // pred_region
        // Predicated region
        $region33: #{minicolumn_forward.1} parent=31 // pred_check
          %p293 = pneg %p48
        $region34: #{minicolumn_forward.1} parent=31 // pred_check_branch
          %295 = sbr.rel (%p293) target = $region36
        $region35: #{minicolumn_forward.1} parent=31 // pred_region
          %s296 = sand.u32 %s38, 1
          %s297 = scalar_lea.sflag [#allocation3], %s296
          %s298 = sand.u32 %s38, 1
          %s299 = smul.addr %s298, 128
          %s300 = scalar_lea.vmem [#allocation2], %s299
          %s301 = smul.u32 16, %s28
          %s303 = ssub.s32 2048, 2048
          %304 = vsyncadd %s297, %s303
          %s305 = smul.addr %s301, 2
          %s306 = smul.addr %s305, 64
          %s307 = scalar_lea.hbm %s0, %s306
          %s308 = sshll.u32 %s300, 4
          %s309 = int_to_ptr.vmem [resolvable:$true] %s308
          %314 = dma.hbm_to_vmem [thread:$0]  %s307, 2048, %s309, %s297, 128, 128, 8
        $region36: #{minicolumn_forward.1} parent=31 // pred_fallthru
          _
        // Predicated region
        $region37: #{minicolumn_forward.1} parent=31 // pred_check
          %p315 = pneg %p74
        $region38: #{minicolumn_forward.1} parent=31 // pred_check_branch
          %317 = sbr.rel (%p315) target = $region40
        $region39: #{minicolumn_forward.1} parent=31 // pred_region
          %s318 = sand.u32 %s28, 1
          %s319 = scalar_lea.sflag [#allocation6], %s318
          %s320 = sand.u32 %s64, 1
          %s321 = smul.addr %s320, 128
          %s322 = scalar_lea.vmem [#allocation5], %s321
          %s323 = smul.u32 16, %s28
          %s325 = ssub.s32 2048, 2048
          %326 = vsyncadd %s319, %s325
          %s327 = smul.addr %s323, 2
          %s328 = smul.addr %s327, 64
          %s329 = scalar_lea.hbm %s1, %s328
          %s330 = sshll.u32 %s322, 4
          %s331 = int_to_ptr.vmem [resolvable:$true] %s330
          %336 = dma.hbm_to_vmem [thread:$0]  %s329, 2048, %s331, %s319, 128, 128, 8
        $region40: #{minicolumn_forward.1} parent=31 // pred_fallthru
          _
      $region32: #{minicolumn_forward.1} parent=5 // pred_fallthru
        _
      %p337 = scmp.le.s32.totalorder 1, %s28
      %p338 = scmp.lt.s32.totalorder %s28, 5
      %p339 = pnand %p337, %p338
      %p340 = pneg %p339
      // Predicated region
      $region41: #{minicolumn_forward.1} parent=5 // pred_check
        _
      $region42: #{minicolumn_forward.1} parent=5 // pred_check_branch
        %342 = sbr.rel (%p339) target = $region44
      $region43: #{minicolumn_forward.1} parent=5 // pred_region
        %s343 = ssub.s32 %s28, 1
        %s344 = sand.u32 %s41, 1
        %s345 = scalar_lea.sflag [#allocation3], %s344
        %s346 = sand.u32 %s41, 1
        %s347 = smul.addr %s346, 128
        %s348 = scalar_lea.vmem [#allocation2], %s347
        // Predicated region
        $region45: #{minicolumn_forward.1} parent=43 // pred_check
          %p349 = pneg %p54
        $region46: #{minicolumn_forward.1} parent=43 // pred_check_branch
          %351 = sbr.rel (%p349) target = $region48
        $region47: #{minicolumn_forward.1} parent=43 // pred_region
          %352 = dma.done %s345, 2048
        $region48: #{minicolumn_forward.1} parent=43 // pred_fallthru
          _
        %s353 = sand.u32 %s33, 1
        %s354 = scalar_lea.sflag [#allocation6], %s353
        %s355 = sand.u32 %s67, 1
        %s356 = smul.addr %s355, 128
        %s357 = scalar_lea.vmem [#allocation5], %s356
        // Predicated region
        $region49: #{minicolumn_forward.1} parent=43 // pred_check
          %p358 = pneg %p80
        $region50: #{minicolumn_forward.1} parent=43 // pred_check_branch
          %360 = sbr.rel (%p358) target = $region52
        $region51: #{minicolumn_forward.1} parent=43 // pred_region
          %361 = dma.done %s354, 2048
        $region52: #{minicolumn_forward.1} parent=43 // pred_fallthru
          _
        // Predicated region
        $region53: #{minicolumn_forward.1} parent=43 // pred_check
          %p362 = pneg %p101
        $region54: #{minicolumn_forward.1} parent=43 // pred_check_branch
          %364 = sbr.rel (%p362) target = $region56
        $region55: #{minicolumn_forward.1} parent=43 // pred_region
          %365 = dma.done [#allocation6], 2048
        $region56: #{minicolumn_forward.1} parent=43 // pred_fallthru
          _
        // Predicated region
        $region57: #{minicolumn_forward.1} parent=43 // pred_check
          %p366 = pneg %p143
        $region58: #{minicolumn_forward.1} parent=43 // pred_check_branch
          %368 = sbr.rel (%p366) target = $region60
        $region59: #{minicolumn_forward.1} parent=43 // pred_region
          %369 = dma.done [#allocation9], 2048
        $region60: #{minicolumn_forward.1} parent=43 // pred_fallthru
          _
        %s370 = sand.u32 %s41, 1
        %s371 = scalar_lea.sflag [#allocation3], %s370
        %s372 = sand.u32 %s41, 1
        %s373 = smul.addr %s372, 128
        %s374 = scalar_lea.vmem [#allocation2], %s373
        %p375 = pneg %p54
        %p376 = pneg %p51
        %s377 = sand.u32 %s33, 1
        %s378 = scalar_lea.sflag [#allocation6], %s377
        %s379 = sand.u32 %s67, 1
        %s380 = smul.addr %s379, 128
        %s381 = scalar_lea.vmem [#allocation5], %s380
        %p382 = pneg %p80
        %p383 = pneg %p77
        %p384 = pneg %p101
        %p385 = pneg %p98
        %p386 = pneg %p122
        %p387 = pneg %p119
        %p388 = pneg %p143
        %p389 = pneg %p140
        %p390 = pneg %p164
        %p391 = pneg %p161
        %p392 = pneg %p190
        %p393 = pneg %p187
        %p394 = scmp.lt.s32.totalorder %s33, 3
        %s395 = scalar_select %p394, %s33, 3
        %s396 = smul.addr %s395, 2
        %s397 = scalar_lea.vmem %s6, %s396
        %p398 = pneg %p216
        %p399 = pneg %p213
        %s400 = sand.u32 %s203, 1
        %s401 = scalar_lea.sflag [#allocation4], %s400
        %s402 = sand.u32 %s203, 1
        %s403 = smul.addr %s402, 64
        %s404 = scalar_lea.vmem [#allocation10], %s403
        %p405 = pneg %p242
        %p406 = pneg %p239
        %s407 = sand.u32 %s229, 1
        %s408 = scalar_lea.sflag [#allocation12], %s407
        %s409 = sand.u32 %s229, 1
        %s410 = smul.addr %s409, 128
        %s411 = scalar_lea.vmem [#allocation11], %s410
        %s412 = smul.u32 16, %s33
        %s413 = smul.u32 16, %s33
        %p414 = scmp.lt.s32.totalorder %s33, 3
        %s415 = scalar_select %p414, %s33, 3
        %s416 = smul.addr %s415, 2
        %s417 = scalar_lea.vmem %s6, %s416
        %s418 = smul.u32 16, %s33
        %s419 = smul.u32 16, %s33
        %v421 = vld [vmem:[%s348] sm:$0xff]
        %v422 = vld [vmem:[%s348 + $0x8] sm:$0xff]
        %v423 = vld [vmem:[%s348 + $0x10] sm:$0xff]
        %v424 = vld [vmem:[%s348 + $0x18] sm:$0xff]
        %v425 = vld [vmem:[%s348 + $0x20] sm:$0xff]
        %v426 = vld [vmem:[%s348 + $0x28] sm:$0xff]
        %v427 = vld [vmem:[%s348 + $0x30] sm:$0xff]
        %v428 = vld [vmem:[%s348 + $0x38] sm:$0xff]
        %v429 = vld [vmem:[%s348 + $0x40] sm:$0xff]
        %v430 = vld [vmem:[%s348 + $0x48] sm:$0xff]
        %v431 = vld [vmem:[%s348 + $0x50] sm:$0xff]
        %v432 = vld [vmem:[%s348 + $0x58] sm:$0xff]
        %v433 = vld [vmem:[%s348 + $0x60] sm:$0xff]
        %v434 = vld [vmem:[%s348 + $0x68] sm:$0xff]
        %v435 = vld [vmem:[%s348 + $0x70] sm:$0xff]
        %v436 = vld [vmem:[%s348 + $0x78] sm:$0xff]
        %v437 = vld [vmem:[%s357] sm:$0xff]
        %v438 = vld [vmem:[%s357 + $0x8] sm:$0xff]
        %v439 = vld [vmem:[%s357 + $0x10] sm:$0xff]
        %v440 = vld [vmem:[%s357 + $0x18] sm:$0xff]
        %v441 = vld [vmem:[%s357 + $0x20] sm:$0xff]
        %v442 = vld [vmem:[%s357 + $0x28] sm:$0xff]
        %v443 = vld [vmem:[%s357 + $0x30] sm:$0xff]
        %v444 = vld [vmem:[%s357 + $0x38] sm:$0xff]
        %v445 = vld [vmem:[%s357 + $0x40] sm:$0xff]
        %v446 = vld [vmem:[%s357 + $0x48] sm:$0xff]
        %v447 = vld [vmem:[%s357 + $0x50] sm:$0xff]
        %v448 = vld [vmem:[%s357 + $0x58] sm:$0xff]
        %v449 = vld [vmem:[%s357 + $0x60] sm:$0xff]
        %v450 = vld [vmem:[%s357 + $0x68] sm:$0xff]
        %v451 = vld [vmem:[%s357 + $0x70] sm:$0xff]
        %v452 = vld [vmem:[%s357 + $0x78] sm:$0xff]
        %v453 = vunpack.c.l.bf16 %v437
        %v454 = vunpack.c.h.bf16 %v437
        %v455 = vunpack.c.l.bf16 %v438
        %v456 = vunpack.c.h.bf16 %v438
        %v457 = vunpack.c.l.bf16 %v439
        %v458 = vunpack.c.h.bf16 %v439
        %v459 = vunpack.c.l.bf16 %v440
        %v460 = vunpack.c.h.bf16 %v440
        %v461 = vunpack.c.l.bf16 %v441
        %v462 = vunpack.c.h.bf16 %v441
        %v463 = vunpack.c.l.bf16 %v442
        %v464 = vunpack.c.h.bf16 %v442
        %v465 = vunpack.c.l.bf16 %v443
        %v466 = vunpack.c.h.bf16 %v443
        %v467 = vunpack.c.l.bf16 %v444
        %v468 = vunpack.c.h.bf16 %v444
        %v469 = vunpack.c.l.bf16 %v445
        %v470 = vunpack.c.h.bf16 %v445
        %v471 = vunpack.c.l.bf16 %v446
        %v472 = vunpack.c.h.bf16 %v446
        %v473 = vunpack.c.l.bf16 %v447
        %v474 = vunpack.c.h.bf16 %v447
        %v475 = vunpack.c.l.bf16 %v448
        %v476 = vunpack.c.h.bf16 %v448
        %v477 = vunpack.c.l.bf16 %v449
        %v478 = vunpack.c.h.bf16 %v449
        %v479 = vunpack.c.l.bf16 %v450
        %v480 = vunpack.c.h.bf16 %v450
        %v481 = vunpack.c.l.bf16 %v451
        %v482 = vunpack.c.h.bf16 %v451
        %v483 = vunpack.c.l.bf16 %v452
        %v484 = vunpack.c.h.bf16 %v452
        %v485 = vunpack.c.l.bf16 %v421
        %v486 = vunpack.c.h.bf16 %v421
        %v487 = vunpack.c.l.bf16 %v422
        %v488 = vunpack.c.h.bf16 %v422
        %v489 = vunpack.c.l.bf16 %v423
        %v490 = vunpack.c.h.bf16 %v423
        %v491 = vunpack.c.l.bf16 %v424
        %v492 = vunpack.c.h.bf16 %v424
        %v493 = vunpack.c.l.bf16 %v425
        %v494 = vunpack.c.h.bf16 %v425
        %v495 = vunpack.c.l.bf16 %v426
        %v496 = vunpack.c.h.bf16 %v426
        %v497 = vunpack.c.l.bf16 %v427
        %v498 = vunpack.c.h.bf16 %v427
        %v499 = vunpack.c.l.bf16 %v428
        %v500 = vunpack.c.h.bf16 %v428
        %v501 = vunpack.c.l.bf16 %v429
        %v502 = vunpack.c.h.bf16 %v429
        %v503 = vunpack.c.l.bf16 %v430
        %v504 = vunpack.c.h.bf16 %v430
        %v505 = vunpack.c.l.bf16 %v431
        %v506 = vunpack.c.h.bf16 %v431
        %v507 = vunpack.c.l.bf16 %v432
        %v508 = vunpack.c.h.bf16 %v432
        %v509 = vunpack.c.l.bf16 %v433
        %v510 = vunpack.c.h.bf16 %v433
        %v511 = vunpack.c.l.bf16 %v434
        %v512 = vunpack.c.h.bf16 %v434
        %v513 = vunpack.c.l.bf16 %v435
        %v514 = vunpack.c.h.bf16 %v435
        %v515 = vunpack.c.l.bf16 %v436
        %v516 = vunpack.c.h.bf16 %v436
        %v517 = vsub.f32 %v453, %v485
        %v518 = vsub.f32 %v454, %v486
        %v519 = vsub.f32 %v455, %v487
        %v520 = vsub.f32 %v456, %v488
        %v521 = vsub.f32 %v457, %v489
        %v522 = vsub.f32 %v458, %v490
        %v523 = vsub.f32 %v459, %v491
        %v524 = vsub.f32 %v460, %v492
        %v525 = vsub.f32 %v461, %v493
        %v526 = vsub.f32 %v462, %v494
        %v527 = vsub.f32 %v463, %v495
        %v528 = vsub.f32 %v464, %v496
        %v529 = vsub.f32 %v465, %v497
        %v530 = vsub.f32 %v466, %v498
        %v531 = vsub.f32 %v467, %v499
        %v532 = vsub.f32 %v468, %v500
        %v533 = vsub.f32 %v469, %v501
        %v534 = vsub.f32 %v470, %v502
        %v535 = vsub.f32 %v471, %v503
        %v536 = vsub.f32 %v472, %v504
        %v537 = vsub.f32 %v473, %v505
        %v538 = vsub.f32 %v474, %v506
        %v539 = vsub.f32 %v475, %v507
        %v540 = vsub.f32 %v476, %v508
        %v541 = vsub.f32 %v477, %v509
        %v542 = vsub.f32 %v478, %v510
        %v543 = vsub.f32 %v479, %v511
        %v544 = vsub.f32 %v480, %v512
        %v545 = vsub.f32 %v481, %v513
        %v546 = vsub.f32 %v482, %v514
        %v547 = vsub.f32 %v483, %v515
        %v548 = vsub.f32 %v484, %v516
        %v549 = vmul.f32 %v517, %v517
        %v550 = vmul.f32 %v518, %v518
        %v551 = vmul.f32 %v519, %v519
        %v552 = vmul.f32 %v520, %v520
        %v553 = vmul.f32 %v521, %v521
        %v554 = vmul.f32 %v522, %v522
        %v555 = vmul.f32 %v523, %v523
        %v556 = vmul.f32 %v524, %v524
        %v557 = vmul.f32 %v525, %v525
        %v558 = vmul.f32 %v526, %v526
        %v559 = vmul.f32 %v527, %v527
        %v560 = vmul.f32 %v528, %v528
        %v561 = vmul.f32 %v529, %v529
        %v562 = vmul.f32 %v530, %v530
        %v563 = vmul.f32 %v531, %v531
        %v564 = vmul.f32 %v532, %v532
        %v565 = vmul.f32 %v533, %v533
        %v566 = vmul.f32 %v534, %v534
        %v567 = vmul.f32 %v535, %v535
        %v568 = vmul.f32 %v536, %v536
        %v569 = vmul.f32 %v537, %v537
        %v570 = vmul.f32 %v538, %v538
        %v571 = vmul.f32 %v539, %v539
        %v572 = vmul.f32 %v540, %v540
        %v573 = vmul.f32 %v541, %v541
        %v574 = vmul.f32 %v542, %v542
        %v575 = vmul.f32 %v543, %v543
        %v576 = vmul.f32 %v544, %v544
        %v577 = vmul.f32 %v545, %v545
        %v578 = vmul.f32 %v546, %v546
        %v579 = vmul.f32 %v547, %v547
        %v580 = vmul.f32 %v548, %v548
        %v581 = vadd.f32 %v549, %v551
        %v582 = vadd.f32 %v581, %v553
        %v583 = vadd.f32 %v582, %v555
        %v584 = vadd.f32 %v583, %v557
        %v585 = vadd.f32 %v584, %v559
        %v586 = vadd.f32 %v585, %v561
        %v587 = vadd.f32 %v586, %v563
        %v588 = vadd.f32 %v587, %v565
        %v589 = vadd.f32 %v588, %v567
        %v590 = vadd.f32 %v589, %v569
        %v591 = vadd.f32 %v590, %v571
        %v592 = vadd.f32 %v591, %v573
        %v593 = vadd.f32 %v592, %v575
        %v594 = vadd.f32 %v593, %v577
        %v595 = vadd.f32 %v594, %v579
        %v596 = vrot.slane %v595, 4
        %v597 = vadd.f32 %v595, %v596
        %v598 = vrot.slane %v597, 2
        %v599 = vadd.f32 %v597, %v598
        %v600 = vrot.slane %v599, 1
        %v601 = vadd.f32 %v599, %v600
        %v602 = vadd.f32 %v550, %v552
        %v603 = vadd.f32 %v602, %v554
        %v604 = vadd.f32 %v603, %v556
        %v605 = vadd.f32 %v604, %v558
        %v606 = vadd.f32 %v605, %v560
        %v607 = vadd.f32 %v606, %v562
        %v608 = vadd.f32 %v607, %v564
        %v609 = vadd.f32 %v608, %v566
        %v610 = vadd.f32 %v609, %v568
        %v611 = vadd.f32 %v610, %v570
        %v612 = vadd.f32 %v611, %v572
        %v613 = vadd.f32 %v612, %v574
        %v614 = vadd.f32 %v613, %v576
        %v615 = vadd.f32 %v614, %v578
        %v616 = vadd.f32 %v615, %v580
        %v617 = vrot.slane %v616, 4
        %v618 = vadd.f32 %v616, %v617
        %v619 = vrot.slane %v618, 2
        %v620 = vadd.f32 %v618, %v619
        %v621 = vrot.slane %v620, 1
        %v622 = vadd.f32 %v620, %v621
        %v625 = vcombine.low %v601, %v622
        %v627 = vunpack.c.l.s4 1966171168
        %v628 = vunpack.c.0.s8 %v627
        %v629 = vlaneseq
        %v630 = vshrl.u32 %v629, 7
        %v631 = vsub.s32 %v628, %v630
        %v632 = vrot.slane %v625, %v631
        %v634 = vunpack.c.l.s4 1966171168
        %v635 = vunpack.c.0.s8 %v634
        %v636 = vlaneseq
        %v637 = vshrl.u32 %v636, 7
        %v638 = vsub.s32 %v635, %v637
        %v639 = vrot.slane %v632, %v638
        %v641 = vlaneseq
        %vm642 = vcmp.ge.s32.totalorder %v641, 0
        %vm643 = vcmp.lt.s32.totalorder %v641, 256
        %vm644 = vmand %vm642, %vm643
        %645 = vst.msk [vmem:[%s417] sm:$0x3] %vm644, %v639
        %v646 = vld [vmem:[#allocation7] sm:$0xf]
        %v647 = vld [vmem:[#allocation7 + $0x4] sm:$0xf]
        %v648 = vld [vmem:[#allocation7 + $0x8] sm:$0xf]
        %v649 = vld [vmem:[#allocation7 + $0xc] sm:$0xf]
        %v650 = vld [vmem:[#allocation7 + $0x10] sm:$0xf]
        %v651 = vld [vmem:[#allocation7 + $0x14] sm:$0xf]
        %v652 = vld [vmem:[#allocation7 + $0x18] sm:$0xf]
        %v653 = vld [vmem:[#allocation7 + $0x1c] sm:$0xf]
        %v654 = vld [vmem:[#allocation7 + $0x20] sm:$0xf]
        %v655 = vld [vmem:[#allocation7 + $0x24] sm:$0xf]
        %v656 = vld [vmem:[#allocation7 + $0x28] sm:$0xf]
        %v657 = vld [vmem:[#allocation7 + $0x2c] sm:$0xf]
        %v658 = vld [vmem:[#allocation7 + $0x30] sm:$0xf]
        %v659 = vld [vmem:[#allocation7 + $0x34] sm:$0xf]
        %v660 = vld [vmem:[#allocation7 + $0x38] sm:$0xf]
        %v661 = vld [vmem:[#allocation7 + $0x3c] sm:$0xf]
        %v662 = vld [vmem:[#allocation7 + $0x40] sm:$0xf]
        %v663 = vld [vmem:[#allocation7 + $0x44] sm:$0xf]
        %v664 = vld [vmem:[#allocation7 + $0x48] sm:$0xf]
        %v665 = vld [vmem:[#allocation7 + $0x4c] sm:$0xf]
        %v666 = vld [vmem:[#allocation7 + $0x50] sm:$0xf]
        %v667 = vld [vmem:[#allocation7 + $0x54] sm:$0xf]
        %v668 = vld [vmem:[#allocation7 + $0x58] sm:$0xf]
        %v669 = vld [vmem:[#allocation7 + $0x5c] sm:$0xf]
        %v670 = vld [vmem:[#allocation7 + $0x60] sm:$0xf]
        %v671 = vld [vmem:[#allocation7 + $0x64] sm:$0xf]
        %v672 = vld [vmem:[#allocation7 + $0x68] sm:$0xf]
        %v673 = vld [vmem:[#allocation7 + $0x6c] sm:$0xf]
        %v674 = vld [vmem:[#allocation7 + $0x70] sm:$0xf]
        %v675 = vld [vmem:[#allocation7 + $0x74] sm:$0xf]
        %v676 = vld [vmem:[#allocation7 + $0x78] sm:$0xf]
        %v677 = vld [vmem:[#allocation7 + $0x7c] sm:$0xf]
        %v678 = vld [vmem:[%s3] sm:$0x1]
        %v679 = vunpack.c.l.bf16 %v678
        %v680 = vlaneseq
        %v681 = vshrl.u32 %v680, 7
        %v682 = vsub.s32 0, %v681
        %v683 = vrot.slane %v679, %v682
        %v700 = vunpack.c.l.b16 %v421
        %v701 = vunpack.c.h.b16 %v421
        %v702 = vunpack.c.l.b16 %v422
        %v703 = vunpack.c.h.b16 %v422
        %v704 = vunpack.c.l.b16 %v423
        %v705 = vunpack.c.h.b16 %v423
        %v706 = vunpack.c.l.b16 %v424
        %v707 = vunpack.c.h.b16 %v424
        %v708 = vunpack.c.l.b16 %v425
        %v709 = vunpack.c.h.b16 %v425
        %v710 = vunpack.c.l.b16 %v426
        %v711 = vunpack.c.h.b16 %v426
        %v712 = vunpack.c.l.b16 %v427
        %v713 = vunpack.c.h.b16 %v427
        %v714 = vunpack.c.l.b16 %v428
        %v715 = vunpack.c.h.b16 %v428
        %v716 = vunpack.c.l.b16 %v429
        %v717 = vunpack.c.h.b16 %v429
        %v718 = vunpack.c.l.b16 %v430
        %v719 = vunpack.c.h.b16 %v430
        %v720 = vunpack.c.l.b16 %v431
        %v721 = vunpack.c.h.b16 %v431
        %v722 = vunpack.c.l.b16 %v432
        %v723 = vunpack.c.h.b16 %v432
        %v724 = vunpack.c.l.b16 %v433
        %v725 = vunpack.c.h.b16 %v433
        %v726 = vunpack.c.l.b16 %v434
        %v727 = vunpack.c.h.b16 %v434
        %v728 = vunpack.c.l.b16 %v435
        %v729 = vunpack.c.h.b16 %v435
        %v730 = vunpack.c.l.b16 %v436
        %v731 = vunpack.c.h.b16 %v436
        %v732 = vpack.c.b16 %v702, %v700
        %v733 = vpack.c.b16 %v703, %v701
        %v734 = vpack.c.b16 %v706, %v704
        %v735 = vpack.c.b16 %v707, %v705
        %v736 = vpack.c.b16 %v710, %v708
        %v737 = vpack.c.b16 %v711, %v709
        %v738 = vpack.c.b16 %v714, %v712
        %v739 = vpack.c.b16 %v715, %v713
        %v740 = vpack.c.b16 %v718, %v716
        %v741 = vpack.c.b16 %v719, %v717
        %v742 = vpack.c.b16 %v722, %v720
        %v743 = vpack.c.b16 %v723, %v721
        %v744 = vpack.c.b16 %v726, %v724
        %v745 = vpack.c.b16 %v727, %v725
        %v746 = vpack.c.b16 %v730, %v728
        %v747 = vpack.c.b16 %v731, %v729
        %v796 = vunpack.c.l.b16 %v646
        %v797 = vunpack.c.l.b16 %v647
        %v798 = vunpack.c.l.b16 %v648
        %v799 = vunpack.c.l.b16 %v649
        %v800 = vunpack.c.l.b16 %v650
        %v801 = vunpack.c.l.b16 %v651
        %v802 = vunpack.c.l.b16 %v652
        %v803 = vunpack.c.l.b16 %v653
        %v804 = vunpack.c.l.b16 %v654
        %v805 = vunpack.c.l.b16 %v655
        %v806 = vunpack.c.l.b16 %v656
        %v807 = vunpack.c.l.b16 %v657
        %v808 = vunpack.c.l.b16 %v658
        %v809 = vunpack.c.l.b16 %v659
        %v810 = vunpack.c.l.b16 %v660
        %v811 = vunpack.c.l.b16 %v661
        %v812 = vunpack.c.l.b16 %v662
        %v813 = vunpack.c.l.b16 %v663
        %v814 = vunpack.c.l.b16 %v664
        %v815 = vunpack.c.l.b16 %v665
        %v816 = vunpack.c.l.b16 %v666
        %v817 = vunpack.c.l.b16 %v667
        %v818 = vunpack.c.l.b16 %v668
        %v819 = vunpack.c.l.b16 %v669
        %v820 = vunpack.c.l.b16 %v670
        %v821 = vunpack.c.l.b16 %v671
        %v822 = vunpack.c.l.b16 %v672
        %v823 = vunpack.c.l.b16 %v673
        %v824 = vunpack.c.l.b16 %v674
        %v825 = vunpack.c.l.b16 %v675
        %v826 = vunpack.c.l.b16 %v676
        %v827 = vunpack.c.l.b16 %v677
        %v828 = vpack.c.b16 %v797, %v796
        %v829 = vpack.c.b16 %v799, %v798
        %v830 = vpack.c.b16 %v801, %v800
        %v831 = vpack.c.b16 %v803, %v802
        %v832 = vpack.c.b16 %v805, %v804
        %v833 = vpack.c.b16 %v807, %v806
        %v834 = vpack.c.b16 %v809, %v808
        %v835 = vpack.c.b16 %v811, %v810
        %v836 = vpack.c.b16 %v813, %v812
        %v837 = vpack.c.b16 %v815, %v814
        %v838 = vpack.c.b16 %v817, %v816
        %v839 = vpack.c.b16 %v819, %v818
        %v840 = vpack.c.b16 %v821, %v820
        %v841 = vpack.c.b16 %v823, %v822
        %v842 = vpack.c.b16 %v825, %v824
        %v843 = vpack.c.b16 %v827, %v826
        %860 = vmatprep.subr.bf16.mxu0 0
        %861 = vmatpush1.bf16.msra.mxu0 %v828
        %862 = vmatprep.subr.bf16.mxu0 0
        %863 = vmatpush1.bf16.msra.mxu0 %v829
        %864 = vmatprep.subr.bf16.mxu0 0
        %865 = vmatpush1.bf16.msra.mxu0 %v830
        %866 = vmatprep.subr.bf16.mxu0 0
        %867 = vmatpush1.bf16.msra.mxu0 %v831
        %868 = vmatprep.subr.bf16.mxu0 0
        %869 = vmatpush1.bf16.msra.mxu0 %v832
        %870 = vmatprep.subr.bf16.mxu0 0
        %871 = vmatpush1.bf16.msra.mxu0 %v833
        %872 = vmatprep.subr.bf16.mxu0 0
        %873 = vmatpush1.bf16.msra.mxu0 %v834
        %874 = vmatprep.subr.bf16.mxu0 0
        %875 = vmatpush1.bf16.msra.mxu0 %v835
        %876 = vmatprep.subr.bf16.mxu0 0
        %877 = vmatpush1.bf16.msra.mxu0 %v836
        %878 = vmatprep.subr.bf16.mxu0 0
        %879 = vmatpush1.bf16.msra.mxu0 %v837
        %880 = vmatprep.subr.bf16.mxu0 0
        %881 = vmatpush1.bf16.msra.mxu0 %v838
        %882 = vmatprep.subr.bf16.mxu0 0
        %883 = vmatpush1.bf16.msra.mxu0 %v839
        %884 = vmatprep.subr.bf16.mxu0 0
        %885 = vmatpush1.bf16.msra.mxu0 %v840
        %886 = vmatprep.subr.bf16.mxu0 0
        %887 = vmatpush1.bf16.msra.mxu0 %v841
        %888 = vmatprep.subr.bf16.mxu0 0
        %889 = vmatpush1.bf16.msra.mxu0 %v842
        %890 = vmatprep.subr.bf16.mxu0 0
        %891 = vmatpush1.bf16.msra.mxu0 %v843
        %892 = vmatprep.mubr.bf16.mxu0 %v733
        %893 = vmatmul.mubr.bf16.gmra.mrb[0].mxu0 %v732
        %v894 = vpop.f32.mrb[0].mxu0
        %v895 = vadd.f32 %v683, %v894
        %v896 = vpop.f32.mrb[0].mxu0
        %v897 = vpop.f32.mrb[0].mxu0
        %v898 = vadd.f32 %v683, %v897
        %v899 = vpop.f32.mrb[0].mxu0
        %900 = vmatprep.mubr.bf16.mxu0 %v735
        %901 = vmatmul.mubr.bf16.gmra.mrb[0].mxu0 %v734
        %v902 = vpop.f32.mrb[0].mxu0
        %v903 = vadd.f32 %v683, %v902
        %v904 = vpop.f32.mrb[0].mxu0
        %v905 = vpop.f32.mrb[0].mxu0
        %v906 = vadd.f32 %v683, %v905
        %v907 = vpop.f32.mrb[0].mxu0
        %908 = vmatprep.mubr.bf16.mxu0 %v737
        %909 = vmatmul.mubr.bf16.gmra.mrb[0].mxu0 %v736
        %v910 = vpop.f32.mrb[0].mxu0
        %v911 = vadd.f32 %v683, %v910
        %v912 = vpop.f32.mrb[0].mxu0
        %v913 = vpop.f32.mrb[0].mxu0
        %v914 = vadd.f32 %v683, %v913
        %v915 = vpop.f32.mrb[0].mxu0
        %916 = vmatprep.mubr.bf16.mxu0 %v739
        %917 = vmatmul.mubr.bf16.gmra.mrb[0].mxu0 %v738
        %v918 = vpop.f32.mrb[0].mxu0
        %v919 = vadd.f32 %v683, %v918
        %v920 = vpop.f32.mrb[0].mxu0
        %v921 = vpop.f32.mrb[0].mxu0
        %v922 = vadd.f32 %v683, %v921
        %v923 = vpop.f32.mrb[0].mxu0
        %924 = vmatprep.mubr.bf16.mxu0 %v741
        %925 = vmatmul.mubr.bf16.gmra.mrb[0].mxu0 %v740
        %v926 = vpop.f32.mrb[0].mxu0
        %v927 = vadd.f32 %v683, %v926
        %v928 = vpop.f32.mrb[0].mxu0
        %v929 = vpop.f32.mrb[0].mxu0
        %v930 = vadd.f32 %v683, %v929
        %v931 = vpop.f32.mrb[0].mxu0
        %932 = vmatprep.mubr.bf16.mxu0 %v743
        %933 = vmatmul.mubr.bf16.gmra.mrb[0].mxu0 %v742
        %v934 = vpop.f32.mrb[0].mxu0
        %v935 = vadd.f32 %v683, %v934
        %v936 = vpop.f32.mrb[0].mxu0
        %v937 = vpop.f32.mrb[0].mxu0
        %v938 = vadd.f32 %v683, %v937
        %v939 = vpop.f32.mrb[0].mxu0
        %940 = vmatprep.mubr.bf16.mxu0 %v745
        %941 = vmatmul.mubr.bf16.gmra.mrb[0].mxu0 %v744
        %v942 = vpop.f32.mrb[0].mxu0
        %v943 = vadd.f32 %v683, %v942
        %v944 = vpop.f32.mrb[0].mxu0
        %v945 = vpop.f32.mrb[0].mxu0
        %v946 = vadd.f32 %v683, %v945
        %v947 = vpop.f32.mrb[0].mxu0
        %948 = vmatprep.mubr.bf16.mxu0 %v747
        %949 = vmatmul.mubr.bf16.gmra.mrb[0].mxu0 %v746
        %v950 = vpop.f32.mrb[0].mxu0
        %v951 = vadd.f32 %v683, %v950
        %v952 = vpop.f32.mrb[0].mxu0
        %v953 = vpop.f32.mrb[0].mxu0
        %v954 = vadd.f32 %v683, %v953
        %v955 = vpop.f32.mrb[0].mxu0
        %956 = vdwg.mxu0
        %v957 = vmax.f32 %v895, 0.0
        %v958 = vmax.f32 %v898, 0.0
        %v959 = vmax.f32 %v903, 0.0
        %v960 = vmax.f32 %v906, 0.0
        %v961 = vmax.f32 %v911, 0.0
        %v962 = vmax.f32 %v914, 0.0
        %v963 = vmax.f32 %v919, 0.0
        %v964 = vmax.f32 %v922, 0.0
        %v965 = vmax.f32 %v927, 0.0
        %v966 = vmax.f32 %v930, 0.0
        %v967 = vmax.f32 %v935, 0.0
        %v968 = vmax.f32 %v938, 0.0
        %v969 = vmax.f32 %v943, 0.0
        %v970 = vmax.f32 %v946, 0.0
        %v971 = vmax.f32 %v951, 0.0
        %v972 = vmax.f32 %v954, 0.0
        %v973 = vpack.c.bf16 %v958, %v957
        %v974 = vpack.c.bf16 %v960, %v959
        %v975 = vpack.c.bf16 %v962, %v961
        %v976 = vpack.c.bf16 %v964, %v963
        %v977 = vpack.c.bf16 %v966, %v965
        %v978 = vpack.c.bf16 %v968, %v967
        %v979 = vpack.c.bf16 %v970, %v969
        %v980 = vpack.c.bf16 %v972, %v971
        %v989 = vunpack.c.l.b16 %v973
        %v990 = vunpack.c.h.b16 %v973
        %v991 = vunpack.c.l.b16 %v974
        %v992 = vunpack.c.h.b16 %v974
        %v993 = vunpack.c.l.b16 %v975
        %v994 = vunpack.c.h.b16 %v975
        %v995 = vunpack.c.l.b16 %v976
        %v996 = vunpack.c.h.b16 %v976
        %v997 = vunpack.c.l.b16 %v977
        %v998 = vunpack.c.h.b16 %v977
        %v999 = vunpack.c.l.b16 %v978
        %v1000 = vunpack.c.h.b16 %v978
        %v1001 = vunpack.c.l.b16 %v979
        %v1002 = vunpack.c.h.b16 %v979
        %v1003 = vunpack.c.l.b16 %v980
        %v1004 = vunpack.c.h.b16 %v980
        %v1005 = vpack.c.b16 %v989, %v989
        %v1006 = vpack.c.b16 %v990, %v990
        %v1007 = vpack.c.b16 %v991, %v991
        %v1008 = vpack.c.b16 %v992, %v992
        %v1009 = vpack.c.b16 %v993, %v993
        %v1010 = vpack.c.b16 %v994, %v994
        %v1011 = vpack.c.b16 %v995, %v995
        %v1012 = vpack.c.b16 %v996, %v996
        %v1013 = vpack.c.b16 %v997, %v997
        %v1014 = vpack.c.b16 %v998, %v998
        %v1015 = vpack.c.b16 %v999, %v999
        %v1016 = vpack.c.b16 %v1000, %v1000
        %v1017 = vpack.c.b16 %v1001, %v1001
        %v1018 = vpack.c.b16 %v1002, %v1002
        %v1019 = vpack.c.b16 %v1003, %v1003
        %v1020 = vpack.c.b16 %v1004, %v1004
        %1037 = vst [vmem:[%s404] sm:$0xf] %v1005
        %1038 = vst [vmem:[%s404 + $0x4] sm:$0xf] %v1006
        %1039 = vst [vmem:[%s404 + $0x8] sm:$0xf] %v1007
        %1040 = vst [vmem:[%s404 + $0xc] sm:$0xf] %v1008
        %1041 = vst [vmem:[%s404 + $0x10] sm:$0xf] %v1009
        %1042 = vst [vmem:[%s404 + $0x14] sm:$0xf] %v1010
        %1043 = vst [vmem:[%s404 + $0x18] sm:$0xf] %v1011
        %1044 = vst [vmem:[%s404 + $0x1c] sm:$0xf] %v1012
        %1045 = vst [vmem:[%s404 + $0x20] sm:$0xf] %v1013
        %1046 = vst [vmem:[%s404 + $0x24] sm:$0xf] %v1014
        %1047 = vst [vmem:[%s404 + $0x28] sm:$0xf] %v1015
        %1048 = vst [vmem:[%s404 + $0x2c] sm:$0xf] %v1016
        %1049 = vst [vmem:[%s404 + $0x30] sm:$0xf] %v1017
        %1050 = vst [vmem:[%s404 + $0x34] sm:$0xf] %v1018
        %1051 = vst [vmem:[%s404 + $0x38] sm:$0xf] %v1019
        %1052 = vst [vmem:[%s404 + $0x3c] sm:$0xf] %v1020
        %v1053 = vld [vmem:[#allocation8] sm:$0xff]
        %v1054 = vld [vmem:[#allocation8 + $0x8] sm:$0xff]
        %v1055 = vld [vmem:[#allocation8 + $0x10] sm:$0xff]
        %v1056 = vld [vmem:[#allocation8 + $0x18] sm:$0xff]
        %v1057 = vld [vmem:[#allocation8 + $0x20] sm:$0xff]
        %v1058 = vld [vmem:[#allocation8 + $0x28] sm:$0xff]
        %v1059 = vld [vmem:[#allocation8 + $0x30] sm:$0xff]
        %v1060 = vld [vmem:[#allocation8 + $0x38] sm:$0xff]
        %v1061 = vld [vmem:[#allocation8 + $0x40] sm:$0xff]
        %v1062 = vld [vmem:[#allocation8 + $0x48] sm:$0xff]
        %v1063 = vld [vmem:[#allocation8 + $0x50] sm:$0xff]
        %v1064 = vld [vmem:[#allocation8 + $0x58] sm:$0xff]
        %v1065 = vld [vmem:[#allocation8 + $0x60] sm:$0xff]
        %v1066 = vld [vmem:[#allocation8 + $0x68] sm:$0xff]
        %v1067 = vld [vmem:[#allocation8 + $0x70] sm:$0xff]
        %v1068 = vld [vmem:[#allocation8 + $0x78] sm:$0xff]
        %v1069 = vld [vmem:[%s5] sm:$0x3]
        %v1070 = vunpack.c.l.bf16 %v1069
        %v1072 = vlaneseq
        %v1073 = vshrl.u32 %v1072, 7
        %v1074 = vsub.s32 0, %v1073
        %v1075 = vrot.slane %v1070, %v1074
        %v1076 = vlaneseq
        %v1077 = vshrl.u32 %v1076, 7
        %v1078 = vsub.s32 2, %v1077
        %v1079 = vrot.slane %v1070, %v1078
        %v1082 = vlaneseq
        %v1083 = vshrl.u32 %v1082, 7
        %v1084 = vsub.s32 0, %v1083
        %v1085 = vrot.slane %v1075, %v1084
        %v1086 = vlaneseq
        %v1087 = vshrl.u32 %v1086, 7
        %v1088 = vsub.s32 0, %v1087
        %v1089 = vrot.slane %v1079, %v1088
        %v1106 = vunpack.c.l.b16 %v1053
        %v1107 = vunpack.c.h.b16 %v1053
        %v1108 = vunpack.c.l.b16 %v1054
        %v1109 = vunpack.c.h.b16 %v1054
        %v1110 = vunpack.c.l.b16 %v1055
        %v1111 = vunpack.c.h.b16 %v1055
        %v1112 = vunpack.c.l.b16 %v1056
        %v1113 = vunpack.c.h.b16 %v1056
        %v1114 = vunpack.c.l.b16 %v1057
        %v1115 = vunpack.c.h.b16 %v1057
        %v1116 = vunpack.c.l.b16 %v1058
        %v1117 = vunpack.c.h.b16 %v1058
        %v1118 = vunpack.c.l.b16 %v1059
        %v1119 = vunpack.c.h.b16 %v1059
        %v1120 = vunpack.c.l.b16 %v1060
        %v1121 = vunpack.c.h.b16 %v1060
        %v1122 = vunpack.c.l.b16 %v1061
        %v1123 = vunpack.c.h.b16 %v1061
        %v1124 = vunpack.c.l.b16 %v1062
        %v1125 = vunpack.c.h.b16 %v1062
        %v1126 = vunpack.c.l.b16 %v1063
        %v1127 = vunpack.c.h.b16 %v1063
        %v1128 = vunpack.c.l.b16 %v1064
        %v1129 = vunpack.c.h.b16 %v1064
        %v1130 = vunpack.c.l.b16 %v1065
        %v1131 = vunpack.c.h.b16 %v1065
        %v1132 = vunpack.c.l.b16 %v1066
        %v1133 = vunpack.c.h.b16 %v1066
        %v1134 = vunpack.c.l.b16 %v1067
        %v1135 = vunpack.c.h.b16 %v1067
        %v1136 = vunpack.c.l.b16 %v1068
        %v1137 = vunpack.c.h.b16 %v1068
        %v1138 = vpack.c.b16 %v1108, %v1106
        %v1139 = vpack.c.b16 %v1109, %v1107
        %v1140 = vpack.c.b16 %v1112, %v1110
        %v1141 = vpack.c.b16 %v1113, %v1111
        %v1142 = vpack.c.b16 %v1116, %v1114
        %v1143 = vpack.c.b16 %v1117, %v1115
        %v1144 = vpack.c.b16 %v1120, %v1118
        %v1145 = vpack.c.b16 %v1121, %v1119
        %v1146 = vpack.c.b16 %v1124, %v1122
        %v1147 = vpack.c.b16 %v1125, %v1123
        %v1148 = vpack.c.b16 %v1128, %v1126
        %v1149 = vpack.c.b16 %v1129, %v1127
        %v1150 = vpack.c.b16 %v1132, %v1130
        %v1151 = vpack.c.b16 %v1133, %v1131
        %v1152 = vpack.c.b16 %v1136, %v1134
        %v1153 = vpack.c.b16 %v1137, %v1135
        %1170 = vmatprep.subr.bf16.mxu0 %v1139
        %1171 = vmatpush1.bf16.msra.mxu0 %v1138
        %1172 = vmatprep.subr.bf16.mxu0 %v1141
        %1173 = vmatpush1.bf16.msra.mxu0 %v1140
        %1174 = vmatprep.subr.bf16.mxu0 %v1143
        %1175 = vmatpush1.bf16.msra.mxu0 %v1142
        %1176 = vmatprep.subr.bf16.mxu0 %v1145
        %1177 = vmatpush1.bf16.msra.mxu0 %v1144
        %1178 = vmatprep.subr.bf16.mxu0 %v1147
        %1179 = vmatpush1.bf16.msra.mxu0 %v1146
        %1180 = vmatprep.subr.bf16.mxu0 %v1149
        %1181 = vmatpush1.bf16.msra.mxu0 %v1148
        %1182 = vmatprep.subr.bf16.mxu0 %v1151
        %1183 = vmatpush1.bf16.msra.mxu0 %v1150
        %1184 = vmatprep.subr.bf16.mxu0 %v1153
        %1185 = vmatpush1.bf16.msra.mxu0 %v1152
        %1186 = vmatprep.subr.bf16.mxu0 0
        %1187 = vmatpush1.bf16.msra.mxu0 0
        %1188 = vmatprep.subr.bf16.mxu0 0
        %1189 = vmatpush1.bf16.msra.mxu0 0
        %1190 = vmatprep.subr.bf16.mxu0 0
        %1191 = vmatpush1.bf16.msra.mxu0 0
        %1192 = vmatprep.subr.bf16.mxu0 0
        %1193 = vmatpush1.bf16.msra.mxu0 0
        %1194 = vmatprep.subr.bf16.mxu0 0
        %1195 = vmatpush1.bf16.msra.mxu0 0
        %1196 = vmatprep.subr.bf16.mxu0 0
        %1197 = vmatpush1.bf16.msra.mxu0 0
        %1198 = vmatprep.subr.bf16.mxu0 0
        %1199 = vmatpush1.bf16.msra.mxu0 0
        %1200 = vmatprep.subr.bf16.mxu0 0
        %1201 = vmatpush1.bf16.msra.mxu0 0
        %1202 = vmatprep.mubr.bf16.mxu0 0
        %1203 = vmatmul.mubr.bf16.gmra.mrb[0].mxu0 %v973
        %v1204 = vpop.f32.mrb[0].mxu0
        %v1205 = vadd.f32 %v1085, %v1204
        %v1206 = vpop.f32.mrb[0].mxu0
        %v1207 = vadd.f32 %v1089, %v1206
        %v1208 = vpop.f32.mrb[0].mxu0
        %v1209 = vadd.f32 %v1085, %v1208
        %v1210 = vpop.f32.mrb[0].mxu0
        %v1211 = vadd.f32 %v1089, %v1210
        %1212 = vmatprep.mubr.bf16.mxu0 0
        %1213 = vmatmul.mubr.bf16.gmra.mrb[0].mxu0 %v974
        %v1214 = vpop.f32.mrb[0].mxu0
        %v1215 = vadd.f32 %v1085, %v1214
        %v1216 = vpop.f32.mrb[0].mxu0
        %v1217 = vadd.f32 %v1089, %v1216
        %v1218 = vpop.f32.mrb[0].mxu0
        %v1219 = vadd.f32 %v1085, %v1218
        %v1220 = vpop.f32.mrb[0].mxu0
        %v1221 = vadd.f32 %v1089, %v1220
        %1222 = vmatprep.mubr.bf16.mxu0 0
        %1223 = vmatmul.mubr.bf16.gmra.mrb[0].mxu0 %v975
        %v1224 = vpop.f32.mrb[0].mxu0
        %v1225 = vadd.f32 %v1085, %v1224
        %v1226 = vpop.f32.mrb[0].mxu0
        %v1227 = vadd.f32 %v1089, %v1226
        %v1228 = vpop.f32.mrb[0].mxu0
        %v1229 = vadd.f32 %v1085, %v1228
        %v1230 = vpop.f32.mrb[0].mxu0
        %v1231 = vadd.f32 %v1089, %v1230
        %1232 = vmatprep.mubr.bf16.mxu0 0
        %1233 = vmatmul.mubr.bf16.gmra.mrb[0].mxu0 %v976
        %v1234 = vpop.f32.mrb[0].mxu0
        %v1235 = vadd.f32 %v1085, %v1234
        %v1236 = vpop.f32.mrb[0].mxu0
        %v1237 = vadd.f32 %v1089, %v1236
        %v1238 = vpop.f32.mrb[0].mxu0
        %v1239 = vadd.f32 %v1085, %v1238
        %v1240 = vpop.f32.mrb[0].mxu0
        %v1241 = vadd.f32 %v1089, %v1240
        %1242 = vmatprep.mubr.bf16.mxu0 0
        %1243 = vmatmul.mubr.bf16.gmra.mrb[0].mxu0 %v977
        %v1244 = vpop.f32.mrb[0].mxu0
        %v1245 = vadd.f32 %v1085, %v1244
        %v1246 = vpop.f32.mrb[0].mxu0
        %v1247 = vadd.f32 %v1089, %v1246
        %v1248 = vpop.f32.mrb[0].mxu0
        %v1249 = vadd.f32 %v1085, %v1248
        %v1250 = vpop.f32.mrb[0].mxu0
        %v1251 = vadd.f32 %v1089, %v1250
        %1252 = vmatprep.mubr.bf16.mxu0 0
        %1253 = vmatmul.mubr.bf16.gmra.mrb[0].mxu0 %v978
        %v1254 = vpop.f32.mrb[0].mxu0
        %v1255 = vadd.f32 %v1085, %v1254
        %v1256 = vpop.f32.mrb[0].mxu0
        %v1257 = vadd.f32 %v1089, %v1256
        %v1258 = vpop.f32.mrb[0].mxu0
        %v1259 = vadd.f32 %v1085, %v1258
        %v1260 = vpop.f32.mrb[0].mxu0
        %v1261 = vadd.f32 %v1089, %v1260
        %1262 = vmatprep.mubr.bf16.mxu0 0
        %1263 = vmatmul.mubr.bf16.gmra.mrb[0].mxu0 %v979
        %v1264 = vpop.f32.mrb[0].mxu0
        %v1265 = vadd.f32 %v1085, %v1264
        %v1266 = vpop.f32.mrb[0].mxu0
        %v1267 = vadd.f32 %v1089, %v1266
        %v1268 = vpop.f32.mrb[0].mxu0
        %v1269 = vadd.f32 %v1085, %v1268
        %v1270 = vpop.f32.mrb[0].mxu0
        %v1271 = vadd.f32 %v1089, %v1270
        %1272 = vmatprep.mubr.bf16.mxu0 0
        %1273 = vmatmul.mubr.bf16.gmra.mrb[0].mxu0 %v980
        %v1274 = vpop.f32.mrb[0].mxu0
        %v1275 = vadd.f32 %v1085, %v1274
        %v1276 = vpop.f32.mrb[0].mxu0
        %v1277 = vadd.f32 %v1089, %v1276
        %v1278 = vpop.f32.mrb[0].mxu0
        %v1279 = vadd.f32 %v1085, %v1278
        %v1280 = vpop.f32.mrb[0].mxu0
        %v1281 = vadd.f32 %v1089, %v1280
        %1282 = vdwg.mxu0
        %v1283 = vmax.f32 %v1205, 0.0
        %v1284 = vmax.f32 %v1207, 0.0
        %v1285 = vmax.f32 %v1209, 0.0
        %v1286 = vmax.f32 %v1211, 0.0
        %v1287 = vmax.f32 %v1215, 0.0
        %v1288 = vmax.f32 %v1217, 0.0
        %v1289 = vmax.f32 %v1219, 0.0
        %v1290 = vmax.f32 %v1221, 0.0
        %v1291 = vmax.f32 %v1225, 0.0
        %v1292 = vmax.f32 %v1227, 0.0
        %v1293 = vmax.f32 %v1229, 0.0
        %v1294 = vmax.f32 %v1231, 0.0
        %v1295 = vmax.f32 %v1235, 0.0
        %v1296 = vmax.f32 %v1237, 0.0
        %v1297 = vmax.f32 %v1239, 0.0
        %v1298 = vmax.f32 %v1241, 0.0
        %v1299 = vmax.f32 %v1245, 0.0
        %v1300 = vmax.f32 %v1247, 0.0
        %v1301 = vmax.f32 %v1249, 0.0
        %v1302 = vmax.f32 %v1251, 0.0
        %v1303 = vmax.f32 %v1255, 0.0
        %v1304 = vmax.f32 %v1257, 0.0
        %v1305 = vmax.f32 %v1259, 0.0
        %v1306 = vmax.f32 %v1261, 0.0
        %v1307 = vmax.f32 %v1265, 0.0
        %v1308 = vmax.f32 %v1267, 0.0
        %v1309 = vmax.f32 %v1269, 0.0
        %v1310 = vmax.f32 %v1271, 0.0
        %v1311 = vmax.f32 %v1275, 0.0
        %v1312 = vmax.f32 %v1277, 0.0
        %v1313 = vmax.f32 %v1279, 0.0
        %v1314 = vmax.f32 %v1281, 0.0
        %v1315 = vpack.c.bf16 %v1285, %v1283
        %v1316 = vpack.c.bf16 %v1286, %v1284
        %v1317 = vpack.c.bf16 %v1289, %v1287
        %v1318 = vpack.c.bf16 %v1290, %v1288
        %v1319 = vpack.c.bf16 %v1293, %v1291
        %v1320 = vpack.c.bf16 %v1294, %v1292
        %v1321 = vpack.c.bf16 %v1297, %v1295
        %v1322 = vpack.c.bf16 %v1298, %v1296
        %v1323 = vpack.c.bf16 %v1301, %v1299
        %v1324 = vpack.c.bf16 %v1302, %v1300
        %v1325 = vpack.c.bf16 %v1305, %v1303
        %v1326 = vpack.c.bf16 %v1306, %v1304
        %v1327 = vpack.c.bf16 %v1309, %v1307
        %v1328 = vpack.c.bf16 %v1310, %v1308
        %v1329 = vpack.c.bf16 %v1313, %v1311
        %v1330 = vpack.c.bf16 %v1314, %v1312
        %v1347 = vunpack.c.l.b16 %v1315
        %v1348 = vunpack.c.l.b16 %v1316
        %v1349 = vunpack.c.h.b16 %v1315
        %v1350 = vunpack.c.h.b16 %v1316
        %v1351 = vunpack.c.l.b16 %v1317
        %v1352 = vunpack.c.l.b16 %v1318
        %v1353 = vunpack.c.h.b16 %v1317
        %v1354 = vunpack.c.h.b16 %v1318
        %v1355 = vunpack.c.l.b16 %v1319
        %v1356 = vunpack.c.l.b16 %v1320
        %v1357 = vunpack.c.h.b16 %v1319
        %v1358 = vunpack.c.h.b16 %v1320
        %v1359 = vunpack.c.l.b16 %v1321
        %v1360 = vunpack.c.l.b16 %v1322
        %v1361 = vunpack.c.h.b16 %v1321
        %v1362 = vunpack.c.h.b16 %v1322
        %v1363 = vunpack.c.l.b16 %v1323
        %v1364 = vunpack.c.l.b16 %v1324
        %v1365 = vunpack.c.h.b16 %v1323
        %v1366 = vunpack.c.h.b16 %v1324
        %v1367 = vunpack.c.l.b16 %v1325
        %v1368 = vunpack.c.l.b16 %v1326
        %v1369 = vunpack.c.h.b16 %v1325
        %v1370 = vunpack.c.h.b16 %v1326
        %v1371 = vunpack.c.l.b16 %v1327
        %v1372 = vunpack.c.l.b16 %v1328
        %v1373 = vunpack.c.h.b16 %v1327
        %v1374 = vunpack.c.h.b16 %v1328
        %v1375 = vunpack.c.l.b16 %v1329
        %v1376 = vunpack.c.l.b16 %v1330
        %v1377 = vunpack.c.h.b16 %v1329
        %v1378 = vunpack.c.h.b16 %v1330
        %v1379 = vpack.c.b16 %v1348, %v1347
        %v1380 = vpack.c.b16 %v1350, %v1349
        %v1381 = vpack.c.b16 %v1352, %v1351
        %v1382 = vpack.c.b16 %v1354, %v1353
        %v1383 = vpack.c.b16 %v1356, %v1355
        %v1384 = vpack.c.b16 %v1358, %v1357
        %v1385 = vpack.c.b16 %v1360, %v1359
        %v1386 = vpack.c.b16 %v1362, %v1361
        %v1387 = vpack.c.b16 %v1364, %v1363
        %v1388 = vpack.c.b16 %v1366, %v1365
        %v1389 = vpack.c.b16 %v1368, %v1367
        %v1390 = vpack.c.b16 %v1370, %v1369
        %v1391 = vpack.c.b16 %v1372, %v1371
        %v1392 = vpack.c.b16 %v1374, %v1373
        %v1393 = vpack.c.b16 %v1376, %v1375
        %v1394 = vpack.c.b16 %v1378, %v1377
        %1411 = vst [vmem:[%s411] sm:$0xff] %v1379
        %1412 = vst [vmem:[%s411 + $0x8] sm:$0xff] %v1380
        %1413 = vst [vmem:[%s411 + $0x10] sm:$0xff] %v1381
        %1414 = vst [vmem:[%s411 + $0x18] sm:$0xff] %v1382
        %1415 = vst [vmem:[%s411 + $0x20] sm:$0xff] %v1383
        %1416 = vst [vmem:[%s411 + $0x28] sm:$0xff] %v1384
        %1417 = vst [vmem:[%s411 + $0x30] sm:$0xff] %v1385
        %1418 = vst [vmem:[%s411 + $0x38] sm:$0xff] %v1386
        %1419 = vst [vmem:[%s411 + $0x40] sm:$0xff] %v1387
        %1420 = vst [vmem:[%s411 + $0x48] sm:$0xff] %v1388
        %1421 = vst [vmem:[%s411 + $0x50] sm:$0xff] %v1389
        %1422 = vst [vmem:[%s411 + $0x58] sm:$0xff] %v1390
        %1423 = vst [vmem:[%s411 + $0x60] sm:$0xff] %v1391
        %1424 = vst [vmem:[%s411 + $0x68] sm:$0xff] %v1392
        %1425 = vst [vmem:[%s411 + $0x70] sm:$0xff] %v1393
        %1426 = vst [vmem:[%s411 + $0x78] sm:$0xff] %v1394
        %p1427 = scmp.lt.s32.totalorder %s33, 3
        %s1428 = scalar_select %p1427, %s33, 3
        %s1429 = smul.addr %s1428, 2
        %s1430 = scalar_lea.vmem %s6, %s1429
        %s1431 = sand.u32 %s203, 1
        %s1432 = scalar_lea.sflag [#allocation4], %s1431
        %s1433 = sand.u32 %s203, 1
        %s1434 = smul.addr %s1433, 64
        %s1435 = scalar_lea.vmem [#allocation10], %s1434
        %s1436 = sand.u32 %s229, 1
        %s1437 = scalar_lea.sflag [#allocation12], %s1436
        %s1438 = sand.u32 %s229, 1
        %s1439 = smul.addr %s1438, 128
        %s1440 = scalar_lea.vmem [#allocation11], %s1439
        // Predicated region
        $region61: #{minicolumn_forward.1} parent=43 // pred_check
          %p1441 = pneg %p187
        $region62: #{minicolumn_forward.1} parent=43 // pred_check_branch
          %1443 = sbr.rel (%p1441) target = $region64
        $region63: #{minicolumn_forward.1} parent=43 // pred_region
          _
        $region64: #{minicolumn_forward.1} parent=43 // pred_fallthru
          _
        // Predicated region
        $region65: #{minicolumn_forward.1} parent=43 // pred_check
          %p1444 = pneg %p213
        $region66: #{minicolumn_forward.1} parent=43 // pred_check_branch
          %1446 = sbr.rel (%p1444) target = $region68
        $region67: #{minicolumn_forward.1} parent=43 // pred_region
          %s1447 = smul.u32 16, %s33
          %s1449 = ssub.s32 1024, 1024
          %1450 = vsyncadd %s1432, %s1449
          %s1451 = smul.addr %s1447, 64
          %s1452 = scalar_lea.hbm %s7, %s1451
          %s1453 = sshll.u32 %s1435, 4
          %s1454 = int_to_ptr.vmem [resolvable:$true] %s1453
          %1459 = dma.vmem_to_hbm [thread:$0]  %s1454, 1024, %s1452, %s1432, 64, 64, 4
        $region68: #{minicolumn_forward.1} parent=43 // pred_fallthru
          _
        // Predicated region
        $region69: #{minicolumn_forward.1} parent=43 // pred_check
          %p1460 = pneg %p239
        $region70: #{minicolumn_forward.1} parent=43 // pred_check_branch
          %1462 = sbr.rel (%p1460) target = $region72
        $region71: #{minicolumn_forward.1} parent=43 // pred_region
          %s1463 = smul.u32 16, %s33
          %s1465 = ssub.s32 2048, 2048
          %1466 = vsyncadd %s1437, %s1465
          %s1467 = smul.addr %s1463, 2
          %s1468 = smul.addr %s1467, 64
          %s1469 = scalar_lea.hbm %s8, %s1468
          %s1470 = sshll.u32 %s1440, 4
          %s1471 = int_to_ptr.vmem [resolvable:$true] %s1470
          %1476 = dma.vmem_to_hbm [thread:$0]  %s1471, 2048, %s1469, %s1437, 128, 128, 8
        $region72: #{minicolumn_forward.1} parent=43 // pred_fallthru
          _
      $region44: #{minicolumn_forward.1} parent=5 // pred_fallthru
        _
      %p1477 = scmp.le.s32.totalorder 2, %s28
      // Predicated region
      $region73: #{minicolumn_forward.1} parent=5 // pred_check
        %p1478 = pneg %p1477
      $region74: #{minicolumn_forward.1} parent=5 // pred_check_branch
        %1480 = sbr.rel (%p1478) target = $region76
      $region75: #{minicolumn_forward.1} parent=5 // pred_region
        %s1481 = ssub.s32 %s28, 2
        // Predicated region
        $region77: #{minicolumn_forward.1} parent=75 // pred_check
          %p1482 = pneg %p193
        $region78: #{minicolumn_forward.1} parent=75 // pred_check_branch
          %1484 = sbr.rel (%p1482) target = $region80
        $region79: #{minicolumn_forward.1} parent=75 // pred_region
          %p1485 = scmp.lt.s32.totalorder %s34, 3
          %s1486 = scalar_select %p1485, %s34, 3
          %s1487 = smul.addr %s1486, 2
          %s1488 = scalar_lea.vmem %s6, %s1487
        $region80: #{minicolumn_forward.1} parent=75 // pred_fallthru
          _
        // Predicated region
        $region81: #{minicolumn_forward.1} parent=75 // pred_check
          %p1489 = pneg %p219
        $region82: #{minicolumn_forward.1} parent=75 // pred_check_branch
          %1491 = sbr.rel (%p1489) target = $region84
        $region83: #{minicolumn_forward.1} parent=75 // pred_region
          %s1492 = sand.u32 %s204, 1
          %s1493 = scalar_lea.sflag [#allocation4], %s1492
          %s1494 = sand.u32 %s204, 1
          %s1495 = smul.addr %s1494, 64
          %s1496 = scalar_lea.vmem [#allocation10], %s1495
          %1497 = dma.done %s1493, 1024
        $region84: #{minicolumn_forward.1} parent=75 // pred_fallthru
          _
        // Predicated region
        $region85: #{minicolumn_forward.1} parent=75 // pred_check
          %p1498 = pneg %p245
        $region86: #{minicolumn_forward.1} parent=75 // pred_check_branch
          %1500 = sbr.rel (%p1498) target = $region88
        $region87: #{minicolumn_forward.1} parent=75 // pred_region
          %s1501 = sand.u32 %s230, 1
          %s1502 = scalar_lea.sflag [#allocation12], %s1501
          %s1503 = sand.u32 %s230, 1
          %s1504 = smul.addr %s1503, 128
          %s1505 = scalar_lea.vmem [#allocation11], %s1504
          %1506 = dma.done %s1502, 2048
        $region88: #{minicolumn_forward.1} parent=75 // pred_fallthru
          _
      $region76: #{minicolumn_forward.1} parent=5 // pred_fallthru
        _
    $region6: #{minicolumn_forward.1} parent=1 // loop_footer
      %s32 = sadd.s32 1, %s28
    $region7: #{minicolumn_forward.1} parent=1 // loop_footer_branch
      %27 = sbr.rel target = $region3
    $region8: #{minicolumn_forward.1} parent=1 // loop_exit
      _
    %1507 = vsyncpa [#allocation3], 1
    %s1508 = scalar_lea.sflag [#allocation3], 1
    %1509 = vsyncpa %s1508, 1
    %1510 = vsyncpa [#allocation6], 1
    %s1511 = scalar_lea.sflag [#allocation6], 1
    %1512 = vsyncpa %s1511, 1
    %1513 = vsyncpa [#allocation9], 1
    %1514 = vsyncpa [#allocation4], 1
    %s1515 = scalar_lea.sflag [#allocation4], 1
    %1516 = vsyncpa %s1515, 1
    %1517 = vsyncpa [#allocation12], 1
    %s1518 = scalar_lea.sflag [#allocation12], 1
    %1519 = vsyncpa %s1518, 1

</llo_original>
